<compile_context>
chip_gen: v7x
topology: tpu7x:2x2x1
jax: 0.10.0
libtpu: 0.0.40
codegen_flags: <defaults>
</compile_context>

<pallas_src>
import functools

import jax
import jax.numpy as jnp
import numpy as np
from jax.experimental import pallas as pl
from jax.experimental.pallas import tpu as pltpu

_LANES = 128      # vreg lane width; all packed slabs use this as the last dim
_ENG_OFF = 64     # lane offset of the energy channels inside the packed slab


def _round_up(x, m):
    return ((x + m - 1) // m) * m


# ----------------------------- Pallas kernels -----------------------------

def _hyper_kernel(x_ref, w1_ref, b1_ref, w2_ref, b2_ref, out_ref, *,
                  channels, channel_chunk):
    """Fused hyper-network weight generation + per-row matvec application.

    x_ref  : (tm, 128) f32 packed slab: latent at lanes [0:S], energy at [64:64+C]
    w1_ref : (128, 128) fused first-layer weights (hyper cols [0:h1], energy-hyper
             cols [h1:h1+h2]); rows beyond S are zero.  Dtype = compute dtype.
    w2_ref : (128, C*128) fused second-layer weights; per-channel 128-lane chunk c
             holds hyper weights at lanes [c*128 : c*128+EC] and energy-hyper
             weights at lanes [c*128+64 : c*128+64+C].  Dtype = compute dtype.
    out_ref: (tm, 128) f32 packed output: transformed at [0:EC], orig_energy at
             [64:64+C].
    """
    x = x_ref[...]                                                   # (tm, 128) f32
    cd = w1_ref.dtype                                                # compute dtype
    h = jnp.dot(x.astype(cd), w1_ref[...],
                preferred_element_type=jnp.float32) + b1_ref[...]
    h = jnp.maximum(h, 0.0).astype(cd)                               # (tm, 128)

    acc = jnp.zeros((x.shape[0], _LANES), jnp.float32)
    c = 0
    while c < channels:                      # static unroll; channels is small
        g = min(channel_chunk, channels - c)
        lo, hi = c * _LANES, (c + g) * _LANES
        # Chunked second-layer matmul (aligned, zero-cost w2 slice); the result is
        # consumed immediately so the live intermediate is only (tm, g*128).
        wgen = (jnp.dot(h, w2_ref[:, lo:hi], preferred_element_type=jnp.float32)
                + b2_ref[:, lo:hi])                                  # (tm, g*128)
        for j in range(g):
            e_c = x[:, _ENG_OFF + c + j:_ENG_OFF + c + j + 1]        # (tm, 1) f32
            acc = acc + e_c * wgen[:, j * _LANES:(j + 1) * _LANES]
        c += g
    out_ref[...] = acc


def _final_matmul_kernel(t_ref, a_ref, o_ref, acc_ref):
    """o = t @ a (K-tiled accumulation) -- fused interp + pos-multiply + reduce."""
    @pl.when(pl.program_id(2) == 0)
    def _():
        acc_ref[...] = jnp.zeros_like(acc_ref)
    acc_ref[...] += jnp.dot(t_ref[...], a_ref[...],
                            preferred_element_type=jnp.float32)

    @pl.when(pl.program_id(2) == pl.num_programs(2) - 1)
    def _():
        o_ref[...] = acc_ref[...]


# ----------------------------- Pallas wrappers -----------------------------

def pack_hyper_params(hyper_p, energy_hyper_p, shape_channels, channels,
                      encoding_channels, compute_dtype=jnp.float32):
    """Lane-pack the two hyper networks into fused (128,128)/(128,C*128) weights.

    Hard layout limits: shape_channels<=64, encoding_channels<=64, channels<=64,
    hidden1+hidden2<=128.  Call once at init (hoisted off the per-forward path).
    """
    w1h, b1h, w2h, b2h = hyper_p            # (S,64), (1,64), (64,C*EC), (1,C*EC)
    w1e, b1e, w2e, b2e = energy_hyper_p     # (S,16), (1,16), (16,C*C),  (1,C*C)
    s, c, ec = shape_channels, channels, encoding_channels
    h1, h2 = w1h.shape[1], w1e.shape[1]
    assert s <= _ENG_OFF and ec <= _ENG_OFF and _ENG_OFF + c <= _LANES, (
        "packed-lane layout needs shape_channels<=64, encoding_channels<=64, "
        "channels<=64")
    assert h1 + h2 <= _LANES, "hidden1 + hidden2 must fit in 128 lanes"

    w1 = jnp.zeros((_LANES, _LANES), jnp.float32)
    w1 = w1.at[:s, :h1].set(w1h)
    w1 = w1.at[:s, h1:h1 + h2].set(w1e)
    b1 = jnp.zeros((1, _LANES), jnp.float32)
    b1 = b1.at[:, :h1].set(b1h)
    b1 = b1.at[:, h1:h1 + h2].set(b1e)

    w2 = jnp.zeros((_LANES, c * _LANES), jnp.float32)
    b2 = jnp.zeros((1, c * _LANES), jnp.float32)
    for ch in range(c):
        base = ch * _LANES
        w2 = w2.at[:h1, base:base + ec].set(w2h[:, ch * ec:(ch + 1) * ec])
        w2 = w2.at[h1:h1 + h2, base + _ENG_OFF:base + _ENG_OFF + c].set(
            w2e[:, ch * c:(ch + 1) * c])
        b2 = b2.at[:, base:base + ec].set(b2h[:, ch * ec:(ch + 1) * ec])
        b2 = b2.at[:, base + _ENG_OFF:base + _ENG_OFF + c].set(
            b2e[:, ch * c:(ch + 1) * c])
    # Weights carry the MXU compute dtype; biases stay f32 (added post-accumulate).
    return (w1.astype(compute_dtype), b1, w2.astype(compute_dtype), b2)


def hyper_apply(latent, eng, packed, channels, encoding_channels,
                tm=512, channel_chunk=2):
    """Run the fused hyper-network kernel over all (b, event, frame) rows."""
    n, s = latent.shape
    c, ec = channels, encoding_channels
    w1, b1, w2, b2 = packed
    assert w2.shape == (_LANES, c * _LANES)

    # Big row tile to amortize the ~0.35us per-grid-step overhead, clamped to the
    # problem; force >=2 grid steps when possible so v7x's 2 TCs both get work.
    tm_eff = min(tm, _round_up(n, 8))
    if n > 8 and _round_up(n, tm_eff) // tm_eff < 2:
        tm_eff = _round_up(-(-n // 2), 8)
    n_pad = _round_up(n, tm_eff)

    # Lane-dense packed input slab (also provides row padding for the grid).
    x = jnp.zeros((n_pad, _LANES), jnp.float32)
    x = x.at[:n, :s].set(latent)
    x = x.at[:n, _ENG_OFF:_ENG_OFF + c].set(eng)

    kernel = functools.partial(_hyper_kernel, channels=c,
                               channel_chunk=channel_chunk)
    out = pl.pallas_call(
        kernel,
        out_shape=jax.ShapeDtypeStruct((n_pad, _LANES), jnp.float32),
        grid=(n_pad // tm_eff,),
        in_specs=[
            pl.BlockSpec((tm_eff, _LANES), lambda i: (i, 0)),
            pl.BlockSpec((_LANES, _LANES), lambda i: (0, 0)),
            pl.BlockSpec((1, _LANES), lambda i: (0, 0)),
            pl.BlockSpec((_LANES, c * _LANES), lambda i: (0, 0)),
            pl.BlockSpec((1, c * _LANES), lambda i: (0, 0)),
        ],
        out_specs=pl.BlockSpec((tm_eff, _LANES), lambda i: (i, 0)),
        compiler_params=pltpu.CompilerParams(dimension_semantics=("parallel",)),
    )(x, w1, b1, w2, b2)

    transformed = out[:n, :ec]
    orig_energy = out[:n, _ENG_OFF:_ENG_OFF + c]
    return transformed, orig_energy


def final_fused(t_r, a, *, bm_max=256, bn_max=512, bk_max=2048):
    """final = t_r @ a, tiled over (BE, NS, K) with a K-accumulating grid."""
    be, k = t_r.shape
    k2, ns = a.shape
    assert k == k2

    bm = be if be <= bm_max else bm_max       # full dim or multiple of 8
    bn = ns if ns <= bn_max else bn_max       # full dim or multiple of 128
    # v7x megacore: if both parallel axes collapse to one step, split rows.
    if be > 8 and pl.cdiv(be, bm) == 1 and pl.cdiv(ns, bn) == 1:
        bm = _round_up(-(-be // 2), 8)

    # K tiling: untiled for moderate K, otherwise 128-aligned chunks (keeps the
    # lane-dense output spec while bounding VMEM on v5e's small scoped default).
    if k <= bk_max:
        bk, k_pad = k, k
    else:
        bk = bk_max
        k_pad = _round_up(k, bk)
        t_r = jnp.pad(t_r, ((0, 0), (0, k_pad - k)))
        a = jnp.pad(a, ((0, k_pad - k), (0, 0)))

    grid = (pl.cdiv(be, bm), pl.cdiv(ns, bn), k_pad // bk)
    return pl.pallas_call(
        _final_matmul_kernel,
        out_shape=jax.ShapeDtypeStruct((be, ns), jnp.float32),
        grid=grid,
        in_specs=[pl.BlockSpec((bm, bk), lambda i, j, l: (i, l)),
                  pl.BlockSpec((bk, bn), lambda i, j, l: (l, j))],
        out_specs=pl.BlockSpec((bm, bn), lambda i, j, l: (i, j)),
        scratch_shapes=[pltpu.VMEM((bm, bn), jnp.float32)],
        compiler_params=pltpu.CompilerParams(
            dimension_semantics=("parallel", "parallel", "arbitrary")),
    )(t_r, a)


# ----------------------------- JAX glue -----------------------------

def _linear_interp_coeffs(in_size, out_size):
    """Indices/weights matching F.interpolate(mode='linear', align_corners=False)."""
    scale = in_size / out_size
    i = jnp.arange(out_size, dtype=jnp.float32)
    src = jnp.maximum((i + 0.5) * scale - 0.5, 0.0)
    i0 = jnp.clip(jnp.floor(src).astype(jnp.int32), 0, in_size - 1)
    i1 = jnp.minimum(i0 + 1, in_size - 1)
    w1 = jnp.clip(src - i0.astype(jnp.float32), 0.0, 1.0)
    w0 = 1.0 - w1
    return i0, i1, w0, w1


def linear_interpolate(x, out_size):
    in_size = x.shape[-1]
    if in_size == out_size:
        return x
    i0, i1, w0, w1 = _linear_interp_coeffs(in_size, out_size)
    return x[..., i0] * w0 + x[..., i1] * w1


def interp_matrix(in_size, out_size):
    """M with (x @ M) == linear_interpolate(x, out_size) along the last axis."""
    i0, i1, w0, w1 = _linear_interp_coeffs(in_size, out_size)
    oh0 = jax.nn.one_hot(i0, in_size, dtype=jnp.float32)   # (out, in)
    oh1 = jax.nn.one_hot(i1, in_size, dtype=jnp.float32)
    return (oh0 * w0[:, None] + oh1 * w1[:, None]).T        # (in, out)


def pos_encoding(encoding_channels, n_samples):
    freqs = jnp.linspace(1e-5, 0.49, encoding_channels, dtype=jnp.float32) ** 2
    t = jnp.linspace(0.0, float(n_samples), n_samples, dtype=jnp.float32)
    return jnp.sin(t[None, :] * freqs[:, None] * jnp.pi)    # (EC, NS)


def make_final_operand(n_frames, encoding_channels, n_samples,
                       compute_dtype=jnp.float32):
    """Constant A[(f,ec),t] = M_interp[f,t] * pos[ec,t]; build once at init."""
    m = interp_matrix(n_frames, n_samples)                   # (F, NS)
    pos = pos_encoding(encoding_channels, n_samples)         # (EC, NS)
    a = (m[:, None, :] * pos[None, :, :]).reshape(
        n_frames * encoding_channels, n_samples)             # (F*EC, NS)
    return pos, a.astype(compute_dtype)


def fft_convolve(a, b):
    n = a.shape[-1]
    pad = [(0, 0)] * (a.ndim - 1) + [(0, n)]
    fa = jnp.fft.rfft(jnp.pad(a, pad), axis=-1)
    fb = jnp.fft.rfft(jnp.pad(b, pad), axis=-1)
    out = jnp.fft.irfft(fa * fb, n=2 * n, axis=-1)
    return out[..., :n]


def exponential_decay(decay_values, n_atoms, n_frames, base_resonance, n_samples):
    # Reshape pattern deliberately mirrors the PyTorch reference bit-for-bit
    # (including its channel/event-permuting view semantics).
    decay_values = jnp.repeat(decay_values.reshape(-1, n_atoms, 1), n_frames, axis=-1)
    resonance_factor = (1.0 - base_resonance) * 0.99
    decay = base_resonance + decay_values * resonance_factor
    decay = jnp.log(decay + 1e-12)
    decay = jnp.cumsum(decay, axis=-1)
    decay = jnp.exp(decay).reshape(-1, n_atoms, n_frames)
    if n_samples != n_frames:
        decay = linear_interpolate(decay, n_samples)
    return decay


def hyper_apply_ref(latent, eng, hyper_p, energy_hyper_p, channels, encoding_channels):
    """Pure-JAX reference for the Pallas hyper kernel (precision HIGHEST)."""
    hi = jax.lax.Precision.HIGHEST
    w1h, b1h, w2h, b2h = hyper_p
    w1e, b1e, w2e, b2e = energy_hyper_p
    h1 = jnp.maximum(jnp.dot(latent, w1h, precision=hi) + b1h, 0.0)
    wt = (jnp.dot(h1, w2h, precision=hi) + b2h).reshape(-1, channels, encoding_channels)
    h2 = jnp.maximum(jnp.dot(latent, w1e, precision=hi) + b1e, 0.0)
    we = (jnp.dot(h2, w2e, precision=hi) + b2e).reshape(-1, channels, channels)
    t = jnp.einsum('nc,nce->ne', eng, wt, precision=hi)
    e = jnp.einsum('nc,ncd->nd', eng, we, precision=hi)
    return t, e


# ----------------------------- Forward pass -----------------------------

def instrument3_forward(energy, transforms, decays, hyper_p, energy_hyper_p,
                        packed_hyper=None, a_const=None, *,
                        encoding_channels, channels, n_frames, n_samples,
                        shape_channels, use_pallas=True):
    batch, n_events, cp, frames = energy.shape

    # decaying envelopes convolved with the energy
    envelopes = exponential_decay(decays, n_events, frames, 0.5, frames)
    envelopes = envelopes.reshape(batch, n_events, cp, frames)
    energy_c = fft_convolve(energy, envelopes)
    energy_c = jnp.transpose(energy_c, (0, 1, 3, 2))               # (B, E, F, C)

    # interpolate shape/transform latents to n_frames
    _, _, shape_shape, shape_frames = transforms.shape
    tr = transforms.reshape(batch * n_events, shape_shape, shape_frames)
    tr = linear_interpolate(tr, n_frames)
    tr = tr.reshape(batch, n_events, shape_shape, frames)
    tr = jnp.transpose(tr, (0, 1, 3, 2))                           # (B, E, F, S)

    latent = tr.reshape(-1, shape_channels)                        # (N, S)
    eng_flat = energy_c.reshape(-1, channels)                      # (N, C)

    if use_pallas:
        # Hoisted constants (fall back to building in-graph if not provided).
        if packed_hyper is None:
            packed_hyper = pack_hyper_params(hyper_p, energy_hyper_p, shape_channels,
                                             channels, encoding_channels)
        if a_const is None:
            _, a_const = make_final_operand(frames, encoding_channels, n_samples)

        transformed_flat, orig_energy_flat = hyper_apply(
            latent, eng_flat, packed_hyper, channels, encoding_channels)

        # Fused frame->sample upsample + positional multiply + channel reduce:
        #   final[be, t] = sum_{f, ec} T[be, f, ec] * M[f, t] * pos[ec, t]
        t_r = transformed_flat.reshape(
            batch * n_events, frames * encoding_channels)          # (BE, F*EC)
        final = final_fused(t_r.astype(a_const.dtype), a_const)    # (BE, NS) f32
    else:
        pos = pos_encoding(encoding_channels, n_samples)
        transformed_flat, orig_energy_flat = hyper_apply_ref(
            latent, eng_flat, hyper_p, energy_hyper_p, channels, encoding_channels)
        transformed = transformed_flat.reshape(
            batch, n_events, frames, encoding_channels)
        transformed = jnp.transpose(transformed, (0, 1, 3, 2)).reshape(
            batch * n_events, encoding_channels, n_frames)
        transformed = linear_interpolate(transformed, n_samples)   # (BE, EC, NS)
        final = jnp.sum(pos[None, :, :] * transformed, axis=1)     # (BE, NS)

    final = final.reshape(batch, n_events, n_samples)

    orig_energy = orig_energy_flat.reshape(batch, n_events, frames, channels)
    orig_energy = jnp.transpose(orig_energy, (0, 1, 3, 2))         # (B, E, C, F)
    return final, orig_energy


# ----------------------------- Parameter init -----------------------------

def init_hyper_params(key, latent_dim, hidden, in_ch, out_ch):
    k1, k2, k3, k4 = jax.random.split(key, 4)
    w1 = jax.random.normal(k1, (latent_dim, hidden), jnp.float32) / np.sqrt(latent_dim)
    b1 = 0.1 * jax.random.normal(k2, (1, hidden), jnp.float32)
    w2 = jax.random.normal(k3, (hidden, in_ch * out_ch), jnp.float32) / np.sqrt(hidden)
    b2 = 0.1 * jax.random.normal(k4, (1, in_ch * out_ch), jnp.float32)
    return (w1, b1, w2, b2)


# ----------------------------- Main -----------------------------

if __name__ == "__main__":
    encoding_channels = 6
    channels = 4
    n_frames = 8
    n_samples = 32
    shape_channels = 5
    batch, n_events = 2, 3
    shape_frames = 5

    key = jax.random.PRNGKey(0)
    k_e, k_t, k_d, k_p1, k_p2 = jax.random.split(key, 5)
    energy = jax.random.normal(k_e, (batch, n_events, channels, n_frames), jnp.float32)
    transforms = jax.random.normal(
        k_t, (batch, n_events, shape_channels, shape_frames), jnp.float32)
    decays = jax.random.uniform(k_d, (batch, n_events, channels), jnp.float32)

    hyper_p = init_hyper_params(k_p1, shape_channels, 64, channels, encoding_channels)
    energy_hyper_p = init_hyper_params(k_p2, shape_channels, 16, channels, channels)

    cfg = dict(encoding_channels=encoding_channels, channels=channels,
               n_frames=n_frames, n_samples=n_samples, shape_channels=shape_channels)

    # Init-time (hoisted) constants: packed hyper weights and the fused A operand.
    packed_f32 = pack_hyper_params(hyper_p, energy_hyper_p, shape_channels, channels,
                                   encoding_channels, compute_dtype=jnp.float32)
    packed_bf16 = pack_hyper_params(hyper_p, energy_hyper_p, shape_channels, channels,
                                    encoding_channels, compute_dtype=jnp.bfloat16)
    _, a_f32 = make_final_operand(n_frames, encoding_channels, n_samples, jnp.float32)
    _, a_bf16 = make_final_operand(n_frames, encoding_channels, n_samples, jnp.bfloat16)

    run = jax.jit(functools.partial(instrument3_forward, use_pallas=True, **cfg))

    # f32 MXU path (tight check).
    final32, orig32 = run(energy, transforms, decays, hyper_p, energy_hyper_p,
                          packed_f32, a_f32)
    jax.block_until_ready((final32, orig32))

    # bf16 MXU-operand path with f32 accumulation (loose check).
    final_bf, orig_bf = run(energy, transforms, decays, hyper_p, energy_hyper_p,
                            packed_bf16, a_bf16)
    jax.block_until_ready((final_bf, orig_bf))

    # pure-JAX reference
    final_ref, orig_ref = instrument3_forward(
        energy, transforms, decays, hyper_p, energy_hyper_p,
        use_pallas=False, **cfg)

    assert final32.shape == (batch, n_events, n_samples)
    assert orig32.shape == (batch, n_events, channels, n_frames)

    np.testing.assert_allclose(np.asarray(final32), np.asarray(final_ref),
                               rtol=2e-3, atol=1e-3)
    np.testing.assert_allclose(np.asarray(orig32), np.asarray(orig_ref),
                               rtol=2e-3, atol=1e-3)
    np.testing.assert_allclose(np.asarray(final_bf), np.asarray(final_ref),
                               rtol=5e-2, atol=1e-1)
    np.testing.assert_allclose(np.asarray(orig_bf), np.asarray(orig_ref),
                               rtol=5e-2, atol=1e-1)

    print("KERNEL_OK")
</pallas_src>

<mosaic_0001>
module attributes {stable_mosaic.version = 11 : i64} {
  func.func @_hyper_kernel(%arg0: i32, %arg1: memref<24x128xf32, #tpu.memory_space<vmem>>, %arg2: memref<128x128xf32, #tpu.memory_space<vmem>>, %arg3: memref<1x128xf32, #tpu.memory_space<vmem>>, %arg4: memref<128x512xf32, #tpu.memory_space<vmem>>, %arg5: memref<1x512xf32, #tpu.memory_space<vmem>>, %arg6: memref<24x128xf32, #tpu.memory_space<vmem>>) attributes {dimension_semantics = [#tpu.dimension_semantics<parallel>], iteration_bounds = array<i64: 2>, scalar_prefetch = 0 : i64, scratch_operands = 0 : i64, tpu.core_type = #tpu.core_type<tc>, window_params = [{transform_indices = @transform_0, window_bounds = array<i64: 24, 128>}, {pipeline_mode = #tpu.pipeline_mode<synchronous>, transform_indices = @transform_1, window_bounds = array<i64: 128, 128>}, {pipeline_mode = #tpu.pipeline_mode<synchronous>, transform_indices = @transform_2, window_bounds = array<i64: 1, 128>}, {pipeline_mode = #tpu.pipeline_mode<synchronous>, transform_indices = @transform_3, window_bounds = array<i64: 128, 512>}, {pipeline_mode = #tpu.pipeline_mode<synchronous>, transform_indices = @transform_4, window_bounds = array<i64: 1, 512>}, {transform_indices = @transform_5, window_bounds = array<i64: 24, 128>}]} {
    %c0 = arith.constant 0 : index
    %c0_0 = arith.constant 0 : index
    %0 = vector.load %arg1[%c0, %c0_0] : memref<24x128xf32, #tpu.memory_space<vmem>>, vector<24x128xf32>
    %c0_1 = arith.constant 0 : index
    %c0_2 = arith.constant 0 : index
    %1 = vector.load %arg2[%c0_1, %c0_2] : memref<128x128xf32, #tpu.memory_space<vmem>>, vector<128x128xf32>
    %cst = arith.constant dense<0.000000e+00> : vector<24x128xf32>
    %2 = tpu.matmul %0, %1, %cst {dimension_numbers = #tpu.dot_dimension_numbers<[1], [0], [0], [1], [0, 0, 1, 1], [], []>} : vector<24x128xf32>, vector<128x128xf32>, vector<24x128xf32> -> vector<24x128xf32>
    %c0_3 = arith.constant 0 : index
    %c0_4 = arith.constant 0 : index
    %3 = vector.load %arg3[%c0_3, %c0_4] : memref<1x128xf32, #tpu.memory_space<vmem>>, vector<1x128xf32>
    %4 = vector.broadcast %3 : vector<1x128xf32> to vector<24x128xf32>
    %5 = arith.addf %2, %4 : vector<24x128xf32>
    %cst_5 = arith.constant 0.000000e+00 : f32
    %6 = vector.broadcast %cst_5 : f32 to vector<24x128xf32>
    %7 = arith.maximumf %5, %6 : vector<24x128xf32>
    %cst_6 = arith.constant 0.000000e+00 : f32
    %8 = vector.broadcast %cst_6 : f32 to vector<24x128xf32>
    %c0_7 = arith.constant 0 : index
    %c0_8 = arith.constant 0 : index
    %9 = vector.load %arg4[%c0_7, %c0_8] : memref<128x512xf32, #tpu.memory_space<vmem>>, vector<128x256xf32>
    %cst_9 = arith.constant dense<0.000000e+00> : vector<24x256xf32>
    %10 = tpu.matmul %7, %9, %cst_9 {dimension_numbers = #tpu.dot_dimension_numbers<[1], [0], [0], [1], [0, 0, 1, 1], [], []>} : vector<24x128xf32>, vector<128x256xf32>, vector<24x256xf32> -> vector<24x256xf32>
    %c0_10 = arith.constant 0 : index
    %c0_11 = arith.constant 0 : index
    %11 = vector.load %arg5[%c0_10, %c0_11] : memref<1x512xf32, #tpu.memory_space<vmem>>, vector<1x256xf32>
    %12 = vector.broadcast %11 : vector<1x256xf32> to vector<24x256xf32>
    %13 = arith.addf %10, %12 : vector<24x256xf32>
    %14 = vector.extract_strided_slice %0 {offsets = [0, 64], sizes = [24, 1], strides = [1, 1]} : vector<24x128xf32> to vector<24x1xf32>
    %15 = vector.extract_strided_slice %13 {offsets = [0, 0], sizes = [24, 128], strides = [1, 1]} : vector<24x256xf32> to vector<24x128xf32>
    %16 = vector.broadcast %14 : vector<24x1xf32> to vector<24x128xf32>
    %17 = arith.mulf %16, %15 : vector<24x128xf32>
    %18 = arith.addf %8, %17 : vector<24x128xf32>
    %19 = vector.extract_strided_slice %0 {offsets = [0, 65], sizes = [24, 1], strides = [1, 1]} : vector<24x128xf32> to vector<24x1xf32>
    %20 = vector.extract_strided_slice %13 {offsets = [0, 128], sizes = [24, 128], strides = [1, 1]} : vector<24x256xf32> to vector<24x128xf32>
    %21 = vector.broadcast %19 : vector<24x1xf32> to vector<24x128xf32>
    %22 = arith.mulf %21, %20 : vector<24x128xf32>
    %23 = arith.addf %18, %22 : vector<24x128xf32>
    %c0_12 = arith.constant 0 : index
    %c256 = arith.constant 256 : index
    %24 = vector.load %arg4[%c0_12, %c256] : memref<128x512xf32, #tpu.memory_space<vmem>>, vector<128x256xf32>
    %cst_13 = arith.constant dense<0.000000e+00> : vector<24x256xf32>
    %25 = tpu.matmul %7, %24, %cst_13 {dimension_numbers = #tpu.dot_dimension_numbers<[1], [0], [0], [1], [0, 0, 1, 1], [], []>} : vector<24x128xf32>, vector<128x256xf32>, vector<24x256xf32> -> vector<24x256xf32>
    %c0_14 = arith.constant 0 : index
    %c256_15 = arith.constant 256 : index
    %26 = vector.load %arg5[%c0_14, %c256_15] : memref<1x512xf32, #tpu.memory_space<vmem>>, vector<1x256xf32>
    %27 = vector.broadcast %26 : vector<1x256xf32> to vector<24x256xf32>
    %28 = arith.addf %25, %27 : vector<24x256xf32>
    %29 = vector.extract_strided_slice %0 {offsets = [0, 66], sizes = [24, 1], strides = [1, 1]} : vector<24x128xf32> to vector<24x1xf32>
    %30 = vector.extract_strided_slice %28 {offsets = [0, 0], sizes = [24, 128], strides = [1, 1]} : vector<24x256xf32> to vector<24x128xf32>
    %31 = vector.broadcast %29 : vector<24x1xf32> to vector<24x128xf32>
    %32 = arith.mulf %31, %30 : vector<24x128xf32>
    %33 = arith.addf %23, %32 : vector<24x128xf32>
    %34 = vector.extract_strided_slice %0 {offsets = [0, 67], sizes = [24, 1], strides = [1, 1]} : vector<24x128xf32> to vector<24x1xf32>
    %35 = vector.extract_strided_slice %28 {offsets = [0, 128], sizes = [24, 128], strides = [1, 1]} : vector<24x256xf32> to vector<24x128xf32>
    %36 = vector.broadcast %34 : vector<24x1xf32> to vector<24x128xf32>
    %37 = arith.mulf %36, %35 : vector<24x128xf32>
    %38 = arith.addf %33, %37 : vector<24x128xf32>
    %c0_16 = arith.constant 0 : index
    %c0_17 = arith.constant 0 : index
    %39 = vector.load %arg6[%c0_16, %c0_17] : memref<24x128xf32, #tpu.memory_space<vmem>>, vector<24x128xf32>
    tpu.vector_store %arg6[%c0_16, %c0_17], %38 {strides = array<i32>} : memref<24x128xf32, #tpu.memory_space<vmem>>, vector<24x128xf32>,
    return
  }
  func.func @transform_0(%arg0: i32) -> (i32, i32) {
    %c0_i32 = arith.constant 0 : i32
    %c0_i32_0 = arith.constant 0 : i32
    return %arg0, %c0_i32 : i32, i32
  }
  func.func @transform_1(%arg0: i32) -> (i32, i32) {
    %c0_i32 = arith.constant 0 : i32
    %c0_i32_0 = arith.constant 0 : i32
    %c0_i32_1 = arith.constant 0 : i32
    return %c0_i32, %c0_i32_0 : i32, i32
  }
  func.func @transform_2(%arg0: i32) -> (i32, i32) {
    %c0_i32 = arith.constant 0 : i32
    %c0_i32_0 = arith.constant 0 : i32
    %c0_i32_1 = arith.constant 0 : i32
    return %c0_i32, %c0_i32_0 : i32, i32
  }
  func.func @transform_3(%arg0: i32) -> (i32, i32) {
    %c0_i32 = arith.constant 0 : i32
    %c0_i32_0 = arith.constant 0 : i32
    %c0_i32_1 = arith.constant 0 : i32
    return %c0_i32, %c0_i32_0 : i32, i32
  }
  func.func @transform_4(%arg0: i32) -> (i32, i32) {
    %c0_i32 = arith.constant 0 : i32
    %c0_i32_0 = arith.constant 0 : i32
    %c0_i32_1 = arith.constant 0 : i32
    return %c0_i32, %c0_i32_0 : i32, i32
  }
  func.func @transform_5(%arg0: i32) -> (i32, i32) {
    %c0_i32 = arith.constant 0 : i32
    %c0_i32_0 = arith.constant 0 : i32
    return %arg0, %c0_i32 : i32, i32
  }
}

module attributes {stable_mosaic.version = 11 : i64} {
  func.func @_final_matmul_kernel(%arg0: i32, %arg1: i32, %arg2: i32, %arg3: memref<6x48xf32, #tpu.memory_space<vmem>>, %arg4: memref<48x32xf32, #tpu.memory_space<vmem>>, %arg5: memref<6x32xf32, #tpu.memory_space<vmem>>, %arg6: memref<6x32xf32, #tpu.memory_space<vmem>>) attributes {dimension_semantics = [#tpu.dimension_semantics<parallel>, #tpu.dimension_semantics<parallel>, #tpu.dimension_semantics<arbitrary>], iteration_bounds = array<i64: 1, 1, 1>, scalar_prefetch = 0 : i64, scratch_operands = 1 : i64, tpu.core_type = #tpu.core_type<tc>, window_params = [{transform_indices = @transform_0, window_bounds = array<i64: 6, 48>}, {transform_indices = @transform_1, window_bounds = array<i64: 48, 32>}, {transform_indices = @transform_2, window_bounds = array<i64: 6, 32>}]} {
    %c0_i32 = arith.constant 0 : i32
    %0 = arith.cmpi eq, %arg2, %c0_i32 : i32
    %1 = arith.extui %0 : i1 to i32
    %c0_i32_0 = arith.constant 0 : i32
    %2 = arith.cmpi ne, %1, %c0_i32_0 : i32
    scf.if %2 {
      %cst_10 = arith.constant 0.000000e+00 : f32
      %12 = vector.broadcast %cst_10 : f32 to vector<6x32xf32>
      %c0_11 = arith.constant 0 : index
      %c0_12 = arith.constant 0 : index
      %13 = vector.load %arg6[%c0_11, %c0_12] : memref<6x32xf32, #tpu.memory_space<vmem>>, vector<6x32xf32>
      tpu.vector_store %arg6[%c0_11, %c0_12], %12 {strides = array<i32>} : memref<6x32xf32, #tpu.memory_space<vmem>>, vector<6x32xf32>,
    } else {
    }
    %c0 = arith.constant 0 : index
    %c0_1 = arith.constant 0 : index
    %3 = vector.load %arg6[%c0, %c0_1] : memref<6x32xf32, #tpu.memory_space<vmem>>, vector<6x32xf32>
    %c0_2 = arith.constant 0 : index
    %c0_3 = arith.constant 0 : index
    %4 = vector.load %arg3[%c0_2, %c0_3] : memref<6x48xf32, #tpu.memory_space<vmem>>, vector<6x48xf32>
    %c0_4 = arith.constant 0 : index
    %c0_5 = arith.constant 0 : index
    %5 = vector.load %arg4[%c0_4, %c0_5] : memref<48x32xf32, #tpu.memory_space<vmem>>, vector<48x32xf32>
    %cst = arith.constant dense<0.000000e+00> : vector<6x32xf32>
    %6 = tpu.matmul %4, %5, %cst {dimension_numbers = #tpu.dot_dimension_numbers<[1], [0], [0], [1], [0, 0, 1, 1], [], []>} : vector<6x48xf32>, vector<48x32xf32>, vector<6x32xf32> -> vector<6x32xf32>
    %7 = arith.addf %3, %6 : vector<6x32xf32>
    %c0_6 = arith.constant 0 : index
    %c0_7 = arith.constant 0 : index
    %8 = vector.load %arg6[%c0_6, %c0_7] : memref<6x32xf32, #tpu.memory_space<vmem>>, vector<6x32xf32>
    tpu.vector_store %arg6[%c0_6, %c0_7], %7 {strides = array<i32>} : memref<6x32xf32, #tpu.memory_space<vmem>>, vector<6x32xf32>,
    %c0_i32_8 = arith.constant 0 : i32
    %9 = arith.cmpi eq, %arg2, %c0_i32_8 : i32
    %10 = arith.extui %9 : i1 to i32
    %c0_i32_9 = arith.constant 0 : i32
    %11 = arith.cmpi ne, %10, %c0_i32_9 : i32
    scf.if %11 {
      %c0_10 = arith.constant 0 : index
      %c0_11 = arith.constant 0 : index
      %12 = vector.load %arg6[%c0_10, %c0_11] : memref<6x32xf32, #tpu.memory_space<vmem>>, vector<6x32xf32>
      %c0_12 = arith.constant 0 : index
      %c0_13 = arith.constant 0 : index
      %13 = vector.load %arg5[%c0_12, %c0_13] : memref<6x32xf32, #tpu.memory_space<vmem>>, vector<6x32xf32>
      tpu.vector_store %arg5[%c0_12, %c0_13], %12 {strides = array<i32>} : memref<6x32xf32, #tpu.memory_space<vmem>>, vector<6x32xf32>,
    } else {
    }
    return
  }
  func.func @transform_0(%arg0: i32, %arg1: i32, %arg2: i32) -> (i32, i32) {
    %c0_i32 = arith.constant 0 : i32
    return %arg0, %arg2 : i32, i32
  }
  func.func @transform_1(%arg0: i32, %arg1: i32, %arg2: i32) -> (i32, i32) {
    %c0_i32 = arith.constant 0 : i32
    return %arg2, %arg1 : i32, i32
  }
  func.func @transform_2(%arg0: i32, %arg1: i32, %arg2: i32) -> (i32, i32) {
    %c0_i32 = arith.constant 0 : i32
    return %arg0, %arg1 : i32, i32
  }
}

</mosaic_0001>

<llo_original>
// kernel: reverse.0
$region0: #{reverse.0}
  %s0 = inlined_call_operand.vmem [shape: f32[2,3,4,7], index: 0, kind: input, shape index: {}]
  %s1 = inlined_call_operand.vmem [shape: f32[2,3,4,7], index: 1, kind: output, shape index: {}]
  %v2 = vlaneseq
  %v3 = vsub.s32 6, %v2
  %4 = vset.pattern.permute.xlu0 %v3
  $region1: #{reverse.0} parent=0
    #allocation0 [shape = 'u8[24576]{0}', space=vmem, size = 0x6000, scoped, tag = 'operand span for operand 0']
    #allocation1 [shape = 'u8[12288]{0}', space=vmem, size = 0x3000, scoped, tag = 'packed  for operand 0']
    #allocation2 [shape = 'u8[24576]{0}', space=vmem, size = 0x6000, scoped, tag = 'operand span for operand 1']
    #allocation3 [shape = 'u8[12288]{0}', space=vmem, size = 0x3000, scoped, tag = 'packed  for operand 1']
    // Predicated region
    $region2: #{reverse.0} parent=1 // pred_check
      _
    $region3: #{reverse.0} parent=1 // pred_check_branch
      %6 = sbr.rel (0) target = $region5
    $region4: #{reverse.0} parent=1 // pred_region
      // Predicated region
      $region6: #{reverse.0} parent=4 // pred_check
        _
      $region7: #{reverse.0} parent=4 // pred_check_branch
        %8 = sbr.rel target = $region9
      $region8: #{reverse.0} parent=4 // pred_region
        // Predicated region
        $region21: #{reverse.0} parent=8 // pred_check
          _
        $region22: #{reverse.0} parent=8 // pred_check_branch
          %33 = sbr.rel (0) target = $region24
        $region23: #{reverse.0} parent=8 // pred_region
          loop: start=0, step=1, limit=1
          $region25: #{reverse.0} parent=23 // loop_pre_header
            _
          $region26: #{reverse.0} parent=23 // loop_header
            %s35 = sphi 0, %s39
            %p36 = scmp.ge.s32.totalorder %s35, 1
            %s40 = sphi %s0, %s0
            %s41 = sphi [#allocation1], [#allocation1]
          $region27: #{reverse.0} parent=23 // loop_header_branch
            %38 = sbr.rel (%p36) target = $region31
          $region28: #{reverse.0} parent=23 // loop_body
            _
          $region29: #{reverse.0} parent=23 // loop_footer
            %s39 = sadd.s32 1, %s35
          $region30: #{reverse.0} parent=23 // loop_footer_branch
            %34 = sbr.rel target = $region26
          $region31: #{reverse.0} parent=23 // loop_exit
            _
          loop: start=0, step=1, limit=1
          $region32: #{reverse.0} parent=23 // loop_pre_header
            _
          $region33: #{reverse.0} parent=23 // loop_header
            %s44 = sphi 0, %s48
            %p45 = scmp.ge.s32.totalorder %s44, 1
            %s49 = sphi %s0, %s0
            %s50 = sphi [#allocation1], [#allocation1]
          $region34: #{reverse.0} parent=23 // loop_header_branch
            %47 = sbr.rel (%p45) target = $region38
          $region35: #{reverse.0} parent=23 // loop_body
            %v51 = vld [vmem:[%s49] sm:$0xf]
            %52 = vst [vmem:[%s50] sm:$0xf] %v51
            %v53 = vld [vmem:[%s49 + $0x4] sm:$0xf]
            %54 = vst [vmem:[%s50 + $0x4] sm:$0xf] %v53
            %v55 = vld [vmem:[%s49 + $0x8] sm:$0xf]
            %56 = vst [vmem:[%s50 + $0x8] sm:$0xf] %v55
            %v57 = vld [vmem:[%s49 + $0xc] sm:$0xf]
            %58 = vst [vmem:[%s50 + $0xc] sm:$0xf] %v57
            %v59 = vld [vmem:[%s49 + $0x10] sm:$0xf]
            %60 = vst [vmem:[%s50 + $0x10] sm:$0xf] %v59
            %v61 = vld [vmem:[%s49 + $0x14] sm:$0xf]
            %62 = vst [vmem:[%s50 + $0x14] sm:$0xf] %v61
          $region36: #{reverse.0} parent=23 // loop_footer
            %s48 = sadd.s32 1, %s44
          $region37: #{reverse.0} parent=23 // loop_footer_branch
            %43 = sbr.rel target = $region33
          $region38: #{reverse.0} parent=23 // loop_exit
            _
        $region24: #{reverse.0} parent=8 // pred_fallthru
          _
      $region9: #{reverse.0} parent=4 // pred_fallthru
        _
      // Predicated region
      $region10: #{reverse.0} parent=4 // pred_check
        _
      $region11: #{reverse.0} parent=4 // pred_check_branch
        %10 = sbr.rel (0) target = $region13
      $region12: #{reverse.0} parent=4 // pred_region
        loop: start=0, step=1, limit=1
        $region14: #{reverse.0} parent=12 // loop_pre_header
          _
        $region15: #{reverse.0} parent=12 // loop_header
          %s13 = sphi 0, %s17
          %p14 = scmp.ge.s32.totalorder %s13, 1
          %s18 = sphi %s0, %s0
          %s19 = sphi [#allocation1], [#allocation1]
        $region16: #{reverse.0} parent=12 // loop_header_branch
          %16 = sbr.rel (%p14) target = $region20
        $region17: #{reverse.0} parent=12 // loop_body
          %v20 = vld [vmem:[%s18] sm:$0xf]
          %21 = vst [vmem:[%s19] sm:$0xf] %v20
          %v22 = vld [vmem:[%s18 + $0x4] sm:$0xf]
          %23 = vst [vmem:[%s19 + $0x4] sm:$0xf] %v22
          %v24 = vld [vmem:[%s18 + $0x8] sm:$0xf]
          %25 = vst [vmem:[%s19 + $0x8] sm:$0xf] %v24
          %v26 = vld [vmem:[%s18 + $0xc] sm:$0xf]
          %27 = vst [vmem:[%s19 + $0xc] sm:$0xf] %v26
          %v28 = vld [vmem:[%s18 + $0x10] sm:$0xf]
          %29 = vst [vmem:[%s19 + $0x10] sm:$0xf] %v28
          %v30 = vld [vmem:[%s18 + $0x14] sm:$0xf]
          %31 = vst [vmem:[%s19 + $0x14] sm:$0xf] %v30
        $region18: #{reverse.0} parent=12 // loop_footer
          %s17 = sadd.s32 1, %s13
        $region19: #{reverse.0} parent=12 // loop_footer_branch
          %12 = sbr.rel target = $region15
        $region20: #{reverse.0} parent=12 // loop_exit
          _
      $region13: #{reverse.0} parent=4 // pred_fallthru
        _
    $region5: #{reverse.0} parent=1 // pred_fallthru
      _
    %63 = vnop
    %s65 = sshllo.u32 0, 4
    %s66 = smul.addr 4, 5
    %s67 = scalar_lea.vmem [#allocation1], %s66
    %v68 = vld [vmem:[%s67] sm:%s65]
    %s69 = scalar_lea.vmem [#allocation0], 40
    %70 = vst [vmem:[%s69] sm:%s65] %v68
    %s71 = smul.addr 4, 4
    %s72 = scalar_lea.vmem [#allocation1], %s71
    %v73 = vld [vmem:[%s72] sm:%s65]
    %s74 = scalar_lea.vmem [#allocation0], 32
    %75 = vst [vmem:[%s74] sm:%s65] %v73
    %s76 = smul.addr 4, 3
    %s77 = scalar_lea.vmem [#allocation1], %s76
    %v78 = vld [vmem:[%s77] sm:%s65]
    %s79 = scalar_lea.vmem [#allocation0], 24
    %80 = vst [vmem:[%s79] sm:%s65] %v78
    %s81 = smul.addr 4, 2
    %s82 = scalar_lea.vmem [#allocation1], %s81
    %v83 = vld [vmem:[%s82] sm:%s65]
    %s84 = scalar_lea.vmem [#allocation0], 16
    %85 = vst [vmem:[%s84] sm:%s65] %v83
    %s86 = scalar_lea.vmem [#allocation1], 4
    %v87 = vld [vmem:[%s86] sm:%s65]
    %s88 = scalar_lea.vmem [#allocation0], 8
    %89 = vst [vmem:[%s88] sm:%s65] %v87
    %v90 = vld [vmem:[#allocation1] sm:%s65]
    %91 = vst [vmem:[#allocation0] sm:%s65] %v90
    %v92 = vld [vmem:[#allocation0] sm:$0xff]
    %93 = vperm.xlu0 %4, %v92
    %v94 = vpop.permute.xlu0 %93
    %95 = vst [vmem:[#allocation2] sm:$0xff] %v94
    %s96 = scalar_lea.vmem [#allocation2], 8
    %s97 = scalar_lea.vmem [#allocation0], 8
    %v98 = vld [vmem:[%s97] sm:$0xff]
    %99 = vperm.xlu0 %4, %v98
    %v100 = vpop.permute.xlu0 %99
    %101 = vst [vmem:[%s96] sm:$0xff] %v100
    %s102 = scalar_lea.vmem [#allocation2], 16
    %s103 = scalar_lea.vmem [#allocation0], 16
    %v104 = vld [vmem:[%s103] sm:$0xff]
    %105 = vperm.xlu0 %4, %v104
    %v106 = vpop.permute.xlu0 %105
    %107 = vst [vmem:[%s102] sm:$0xff] %v106
    %s108 = scalar_lea.vmem [#allocation2], 24
    %s109 = scalar_lea.vmem [#allocation0], 24
    %v110 = vld [vmem:[%s109] sm:$0xff]
    %111 = vperm.xlu0 %4, %v110
    %v112 = vpop.permute.xlu0 %111
    %113 = vst [vmem:[%s108] sm:$0xff] %v112
    %s114 = scalar_lea.vmem [#allocation2], 32
    %s115 = scalar_lea.vmem [#allocation0], 32
    %v116 = vld [vmem:[%s115] sm:$0xff]
    %117 = vperm.xlu0 %4, %v116
    %v118 = vpop.permute.xlu0 %117
    %119 = vst [vmem:[%s114] sm:$0xff] %v118
    %s120 = scalar_lea.vmem [#allocation2], 40
    %s121 = scalar_lea.vmem [#allocation0], 40
    %v122 = vld [vmem:[%s121] sm:$0xff]
    %123 = vperm.xlu0 %4, %v122
    %v124 = vpop.permute.xlu0 %123
    %125 = vst [vmem:[%s120] sm:$0xff] %v124
    %s127 = sshllo.u32 0, 4
    %v129 = vld [vmem:[#allocation2] sm:%s127]
    %s130 = sshllo.u32 0, 4
    %131 = vst [vmem:[#allocation3] sm:%s130] %v129
    %s132 = scalar_lea.vmem [#allocation2], 8
    %v133 = vld [vmem:[%s132] sm:%s127]
    %s134 = sshllo.u32 0, 4
    %s135 = scalar_lea.vmem [#allocation3], 4
    %136 = vst [vmem:[%s135] sm:%s134] %v133
    %s137 = scalar_lea.vmem [#allocation2], 16
    %v138 = vld [vmem:[%s137] sm:%s127]
    %s139 = sshllo.u32 0, 4
    %s140 = smul.addr 4, 2
    %s141 = scalar_lea.vmem [#allocation3], %s140
    %142 = vst [vmem:[%s141] sm:%s139] %v138
    %s143 = scalar_lea.vmem [#allocation2], 24
    %v144 = vld [vmem:[%s143] sm:%s127]
    %s145 = sshllo.u32 0, 4
    %s146 = smul.addr 4, 3
    %s147 = scalar_lea.vmem [#allocation3], %s146
    %148 = vst [vmem:[%s147] sm:%s145] %v144
    %s149 = scalar_lea.vmem [#allocation2], 32
    %v150 = vld [vmem:[%s149] sm:%s127]
    %s151 = sshllo.u32 0, 4
    %s152 = smul.addr 4, 4
    %s153 = scalar_lea.vmem [#allocation3], %s152
    %154 = vst [vmem:[%s153] sm:%s151] %v150
    %s155 = scalar_lea.vmem [#allocation2], 40
    %v156 = vld [vmem:[%s155] sm:%s127]
    %s157 = sshllo.u32 0, 4
    %s158 = smul.addr 4, 5
    %s159 = scalar_lea.vmem [#allocation3], %s158
    %160 = vst [vmem:[%s159] sm:%s157] %v156
    // Predicated region
    $region39: #{reverse.0} parent=1 // pred_check
      _
    $region40: #{reverse.0} parent=1 // pred_check_branch
      %162 = sbr.rel (0) target = $region42
    $region41: #{reverse.0} parent=1 // pred_region
      // Predicated region
      $region43: #{reverse.0} parent=41 // pred_check
        _
      $region44: #{reverse.0} parent=41 // pred_check_branch
        %164 = sbr.rel target = $region46
      $region45: #{reverse.0} parent=41 // pred_region
        // Predicated region
        $region58: #{reverse.0} parent=45 // pred_check
          _
        $region59: #{reverse.0} parent=45 // pred_check_branch
          %189 = sbr.rel (0) target = $region61
        $region60: #{reverse.0} parent=45 // pred_region
          loop: start=0, step=1, limit=1
          $region62: #{reverse.0} parent=60 // loop_pre_header
            _
          $region63: #{reverse.0} parent=60 // loop_header
            %s191 = sphi 0, %s195
            %p192 = scmp.ge.s32.totalorder %s191, 1
            %s196 = sphi [#allocation3], [#allocation3]
            %s197 = sphi %s1, %s1
          $region64: #{reverse.0} parent=60 // loop_header_branch
            %194 = sbr.rel (%p192) target = $region68
          $region65: #{reverse.0} parent=60 // loop_body
            _
          $region66: #{reverse.0} parent=60 // loop_footer
            %s195 = sadd.s32 1, %s191
          $region67: #{reverse.0} parent=60 // loop_footer_branch
            %190 = sbr.rel target = $region63
          $region68: #{reverse.0} parent=60 // loop_exit
            _
          loop: start=0, step=1, limit=1
          $region69: #{reverse.0} parent=60 // loop_pre_header
            _
          $region70: #{reverse.0} parent=60 // loop_header
            %s200 = sphi 0, %s204
            %p201 = scmp.ge.s32.totalorder %s200, 1
            %s205 = sphi [#allocation3], [#allocation3]
            %s206 = sphi %s1, %s1
          $region71: #{reverse.0} parent=60 // loop_header_branch
            %203 = sbr.rel (%p201) target = $region75
          $region72: #{reverse.0} parent=60 // loop_body
            %v207 = vld [vmem:[%s205] sm:$0xf]
            %208 = vst [vmem:[%s206] sm:$0xf] %v207
            %v209 = vld [vmem:[%s205 + $0x4] sm:$0xf]
            %210 = vst [vmem:[%s206 + $0x4] sm:$0xf] %v209
            %v211 = vld [vmem:[%s205 + $0x8] sm:$0xf]
            %212 = vst [vmem:[%s206 + $0x8] sm:$0xf] %v211
            %v213 = vld [vmem:[%s205 + $0xc] sm:$0xf]
            %214 = vst [vmem:[%s206 + $0xc] sm:$0xf] %v213
            %v215 = vld [vmem:[%s205 + $0x10] sm:$0xf]
            %216 = vst [vmem:[%s206 + $0x10] sm:$0xf] %v215
            %v217 = vld [vmem:[%s205 + $0x14] sm:$0xf]
            %218 = vst [vmem:[%s206 + $0x14] sm:$0xf] %v217
          $region73: #{reverse.0} parent=60 // loop_footer
            %s204 = sadd.s32 1, %s200
          $region74: #{reverse.0} parent=60 // loop_footer_branch
            %199 = sbr.rel target = $region70
          $region75: #{reverse.0} parent=60 // loop_exit
            _
        $region61: #{reverse.0} parent=45 // pred_fallthru
          _
      $region46: #{reverse.0} parent=41 // pred_fallthru
        _
      // Predicated region
      $region47: #{reverse.0} parent=41 // pred_check
        _
      $region48: #{reverse.0} parent=41 // pred_check_branch
        %166 = sbr.rel (0) target = $region50
      $region49: #{reverse.0} parent=41 // pred_region
        loop: start=0, step=1, limit=1
        $region51: #{reverse.0} parent=49 // loop_pre_header
          _
        $region52: #{reverse.0} parent=49 // loop_header
          %s169 = sphi 0, %s173
          %p170 = scmp.ge.s32.totalorder %s169, 1
          %s174 = sphi [#allocation3], [#allocation3]
          %s175 = sphi %s1, %s1
        $region53: #{reverse.0} parent=49 // loop_header_branch
          %172 = sbr.rel (%p170) target = $region57
        $region54: #{reverse.0} parent=49 // loop_body
          %v176 = vld [vmem:[%s174] sm:$0xf]
          %177 = vst [vmem:[%s175] sm:$0xf] %v176
          %v178 = vld [vmem:[%s174 + $0x4] sm:$0xf]
          %179 = vst [vmem:[%s175 + $0x4] sm:$0xf] %v178
          %v180 = vld [vmem:[%s174 + $0x8] sm:$0xf]
          %181 = vst [vmem:[%s175 + $0x8] sm:$0xf] %v180
          %v182 = vld [vmem:[%s174 + $0xc] sm:$0xf]
          %183 = vst [vmem:[%s175 + $0xc] sm:$0xf] %v182
          %v184 = vld [vmem:[%s174 + $0x10] sm:$0xf]
          %185 = vst [vmem:[%s175 + $0x10] sm:$0xf] %v184
          %v186 = vld [vmem:[%s174 + $0x14] sm:$0xf]
          %187 = vst [vmem:[%s175 + $0x14] sm:$0xf] %v186
        $region55: #{reverse.0} parent=49 // loop_footer
          %s173 = sadd.s32 1, %s169
        $region56: #{reverse.0} parent=49 // loop_footer_branch
          %168 = sbr.rel target = $region52
        $region57: #{reverse.0} parent=49 // loop_exit
          _
      $region50: #{reverse.0} parent=41 // pred_fallthru
        _
    $region42: #{reverse.0} parent=1 // pred_fallthru
      _
    %219 = vnop

// kernel: instrument3_forward.3
$region0: #{instrument3_forward.3}
  #allocation0 [shape = 'u32[]', space=smem, size = 0x4, offset = 0x4, fixed_abs, tag = 'smem constant byte address 0x4 - core index']
  #allocation1 [shape = 'u32[144,128]{1,0:T(1,128)}', space=vmem, size = 0x12000, scoped, tag = 'internal scratch']
  #allocation2 [shape = 'f32[6,32]{1,0:T(8,128)}', space=vmem, size = 0x1000, scoped, tag = 'scratch operand']
  %s0 = inlined_call_operand.vmem [shape: f32[6,48], index: 0, kind: input, shape index: {}]
  %s1 = inlined_call_operand.vmem [shape: f32[48,32], index: 1, kind: input, shape index: {}]
  %s2 = inlined_call_operand.vmem [shape: f32[6,32], index: 2, kind: output, shape index: {}]
  %s3 = sld [smem:[#allocation0]]
  $region26: #{instrument3_forward.3} parent=0
    _
  %s5 = ssub.s32 1, %s3
  %s6 = scalar_select 0, %s5, %s3
  // Predicated region
  $region2: #{instrument3_forward.3} parent=0 // pred_check
    _
  $region3: #{instrument3_forward.3} parent=0 // pred_check_branch
    %8 = sbr.rel (0) target = $region5
  $region4: #{instrument3_forward.3} parent=0 // pred_region
    _
  $region5: #{instrument3_forward.3} parent=0 // pred_fallthru
    _
  // Predicated region
  $region6: #{instrument3_forward.3} parent=0 // pred_check
    _
  $region7: #{instrument3_forward.3} parent=0 // pred_check_branch
    %10 = sbr.rel (0) target = $region9
  $region8: #{instrument3_forward.3} parent=0 // pred_region
    _
  $region9: #{instrument3_forward.3} parent=0 // pred_fallthru
    _
  %p11 = scmp.eq.s32.totalorder 0, 0
  // Predicated region
  $region10: #{instrument3_forward.3} parent=0 // pred_check
    %p12 = pneg %p11
  $region11: #{instrument3_forward.3} parent=0 // pred_check_branch
    %14 = sbr.rel (%p12) target = $region13
  $region12: #{instrument3_forward.3} parent=0 // pred_region
    %vm15 = vcmask 259072
    %16 = vst.msk [vmem:[#allocation2] sm:$0x3f] %vm15, 0.0
  $region13: #{instrument3_forward.3} parent=0 // pred_fallthru
    _
  %v17 = vld [vmem:[#allocation2] sm:$0x3f]
  %v18 = vld [vmem:[%s0] sm:$0x3f]
  %v19 = vld [vmem:[%s1] sm:$0xff]
  %v20 = vld [vmem:[%s1 + $0x8] sm:$0xff]
  %v21 = vld [vmem:[%s1 + $0x10] sm:$0xff]
  %v22 = vld [vmem:[%s1 + $0x18] sm:$0xff]
  %v23 = vld [vmem:[%s1 + $0x20] sm:$0xff]
  %v24 = vld [vmem:[%s1 + $0x28] sm:$0xff]
  %vm25 = vcmask 392192
  %v27 = vsel %vm25, %v18, 0
  %29 = vmatprep.subr.mxu0 0.0
  %30 = vmatpush1.msra.mxu0 %v19
  %31 = vmatprep.subr.mxu0 0.0
  %32 = vmatpush1.msra.mxu0 %v20
  %33 = vmatprep.subr.mxu0 0.0
  %34 = vmatpush1.msra.mxu0 %v21
  %35 = vmatprep.subr.mxu0 0.0
  %36 = vmatpush1.msra.mxu0 %v22
  %37 = vmatprep.subr.mxu0 0.0
  %38 = vmatpush1.msra.mxu0 %v23
  %39 = vmatprep.subr.mxu0 0.0
  %40 = vmatpush1.msra.mxu0 %v24
  %41 = vmatprep.subr.mxu0 0.0
  %42 = vmatpush1.msra.mxu0 0.0
  %43 = vmatprep.subr.mxu0 0.0
  %44 = vmatpush1.msra.mxu0 0.0
  %45 = vmatprep.subr.mxu0 0.0
  %46 = vmatpush1.msra.mxu0 0.0
  %47 = vmatprep.subr.mxu0 0.0
  %48 = vmatpush1.msra.mxu0 0.0
  %49 = vmatprep.subr.mxu0 0.0
  %50 = vmatpush1.msra.mxu0 0.0
  %51 = vmatprep.subr.mxu0 0.0
  %52 = vmatpush1.msra.mxu0 0.0
  %53 = vmatprep.subr.mxu0 0.0
  %54 = vmatpush1.msra.mxu0 0.0
  %55 = vmatprep.subr.mxu0 0.0
  %56 = vmatpush1.msra.mxu0 0.0
  %57 = vmatprep.subr.mxu0 0.0
  %58 = vmatpush1.msra.mxu0 0.0
  %59 = vmatprep.subr.mxu0 0.0
  %60 = vmatpush1.msra.mxu0 0.0
  %61 = vmatprep.subr.mxu0 0.0
  %62 = vmatpush1.msra.mxu0 0.0
  %63 = vmatprep.subr.mxu0 0.0
  %64 = vmatpush1.msra.mxu0 0.0
  %65 = vmatprep.subr.mxu0 0.0
  %66 = vmatpush1.msra.mxu0 0.0
  %67 = vmatprep.subr.mxu0 0.0
  %68 = vmatpush1.msra.mxu0 0.0
  %69 = vmatprep.subr.mxu0 0.0
  %70 = vmatpush1.msra.mxu0 0.0
  %71 = vmatprep.subr.mxu0 0.0
  %72 = vmatpush1.msra.mxu0 0.0
  %73 = vmatprep.subr.mxu0 0.0
  %74 = vmatpush1.msra.mxu0 0.0
  %75 = vmatprep.subr.mxu0 0.0
  %76 = vmatpush1.msra.mxu0 0.0
  %77 = vmatprep.subr.mxu0 0.0
  %78 = vmatpush1.msra.mxu0 0.0
  %79 = vmatprep.subr.mxu0 0.0
  %80 = vmatpush1.msra.mxu0 0.0
  %81 = vmatprep.subr.mxu0 0.0
  %82 = vmatpush1.msra.mxu0 0.0
  %83 = vmatprep.subr.mxu0 0.0
  %84 = vmatpush1.msra.mxu0 0.0
  %85 = vmatprep.subr.mxu0 0.0
  %86 = vmatpush1.msra.mxu0 0.0
  %87 = vmatprep.subr.mxu0 0.0
  %88 = vmatpush1.msra.mxu0 0.0
  %89 = vmatprep.subr.mxu0 0.0
  %90 = vmatpush1.msra.mxu0 0.0
  %91 = vmatprep.subr.mxu0 0.0
  %92 = vmatpush1.msra.mxu0 0.0
  %93 = vmatprep.mubr.f32.mxu0 0.0
  %94 = vmatmul.mubr.f32.gmra.mrb[0].mxu0 %v27
  %v95 = vpop.f32.mrb[0].mxu0
  %v96 = vadd.f32 0.0, %v95
  %v97 = vpop.f32.mrb[0].mxu0
  %98 = vdwg.mxu0
  %v99 = vadd.f32 %v17, %v96
  %vm100 = vcmask 259072
  %101 = vst.msk [vmem:[#allocation2] sm:$0x3f] %vm100, %v99
  // Predicated region
  $region14: #{instrument3_forward.3} parent=0 // pred_check
    %p102 = pneg %p11
  $region15: #{instrument3_forward.3} parent=0 // pred_check_branch
    %104 = sbr.rel (%p102) target = $region17
  $region16: #{instrument3_forward.3} parent=0 // pred_region
    %v105 = vld [vmem:[#allocation2] sm:$0x3f]
    %106 = vst.msk [vmem:[%s2] sm:$0x3f] %vm100, %v105
  $region17: #{instrument3_forward.3} parent=0 // pred_fallthru
    _
  // Predicated region
  $region18: #{instrument3_forward.3} parent=0 // pred_check
    _
  $region19: #{instrument3_forward.3} parent=0 // pred_check_branch
    %108 = sbr.rel (0) target = $region21
  $region20: #{instrument3_forward.3} parent=0 // pred_region
    _
  $region21: #{instrument3_forward.3} parent=0 // pred_fallthru
    _
  // Predicated region
  $region22: #{instrument3_forward.3} parent=0 // pred_check
    _
  $region23: #{instrument3_forward.3} parent=0 // pred_check_branch
    %110 = sbr.rel (0) target = $region25
  $region24: #{instrument3_forward.3} parent=0 // pred_region
    _
  $region25: #{instrument3_forward.3} parent=0 // pred_fallthru
    _

// kernel: instrument3_forward.2
$region0: #{instrument3_forward.2}
  #allocation0 [shape = 'u32[]', space=smem, size = 0x4, offset = 0x4, fixed_abs, tag = 'smem constant byte address 0x4 - core index']
  #allocation1 [shape = 'u32[144,128]{1,0:T(1,128)}', space=vmem, size = 0x12000, scoped, tag = 'internal scratch']
  %s0 = inlined_call_operand.vmem [shape: f32[48,128], index: 0, kind: input, shape index: {}]
  %s1 = inlined_call_operand.vmem [shape: f32[128,128], index: 1, kind: input, shape index: {}]
  %s2 = inlined_call_operand.vmem [shape: f32[1,128], index: 2, kind: input, shape index: {}]
  %s3 = inlined_call_operand.vmem [shape: f32[128,512], index: 3, kind: input, shape index: {}]
  %s4 = inlined_call_operand.vmem [shape: f32[1,512], index: 4, kind: input, shape index: {}]
  %s5 = inlined_call_operand.vmem [shape: f32[48,128], index: 5, kind: output, shape index: {}]
  %s6 = sld [smem:[#allocation0]]
  $region53: #{instrument3_forward.2} parent=0
    _
  %s8 = ssub.s32 1, %s6
  %s9 = scalar_select 0, %s8, %s6
  loop: start=0, step=1, limit=4
  $region2: #{instrument3_forward.2} parent=0 // loop_pre_header
    _
  $region3: #{instrument3_forward.2} parent=0 // loop_header
    %s11 = sphi 0, %s15
    %p12 = scmp.ge.s32.totalorder %s11, 4
    %s21 = sphi 0, %s23
    %s24 = sphi 0, %s21
    %s25 = sphi 0, %s24
    %s41 = sphi 0, %s25
    %s45 = sphi 0, %s45
    %s47 = sphi 0, %s45
    %s48 = sphi 0, %s47
    %s62 = sphi 0, %s48
    %s66 = sphi 0, %s66
    %s68 = sphi 0, %s66
    %s69 = sphi 0, %s68
    %s83 = sphi 0, %s69
    %s87 = sphi 0, %s87
    %s89 = sphi 0, %s87
    %s90 = sphi 0, %s89
    %s104 = sphi 0, %s90
    %s108 = sphi 0, %s108
    %s110 = sphi 0, %s108
    %s111 = sphi 0, %s110
    %s125 = sphi 0, %s111
    %s131 = sphi 0, %s133
    %s134 = sphi 0, %s131
    %s135 = sphi 0, %s134
    %s151 = sphi 0, %s135
  $region4: #{instrument3_forward.2} parent=0 // loop_header_branch
    %14 = sbr.rel (%p12) target = $region8
  $region5: #{instrument3_forward.2} parent=0 // loop_body
    %s16 = ssub.s32 %s11, 1
    %s17 = ssub.s32 %s11, 2
    %s18 = sadd.s32 %s11, 1
    %s19 = ssub.s32 %s11, %s18
    %p20 = scmp.eq.s32.totalorder %s19, 0
    %s22 = sadd.s32 %s21, 1
    %s23 = scalar_select %p20, %s21, %s22
    %p26 = pneg %p20
    %p27 = scmp.eq.s32.totalorder %s11, 1
    %p28 = por %p26, %p27
    %p29 = scmp.ne.s32.totalorder %s21, %s24
    %p30 = scmp.eq.s32.totalorder %s11, 0
    %p31 = por %p29, %p30
    %p32 = scmp.ne.s32.totalorder %s21, %s24
    %p33 = scmp.eq.s32.totalorder %s16, 1
    %p34 = por %p32, %p33
    %p35 = scmp.ne.s32.totalorder %s24, %s25
    %p36 = scmp.eq.s32.totalorder %s16, 0
    %p37 = por %p35, %p36
    %p38 = scmp.ne.s32.totalorder %s24, %s25
    %p39 = scmp.eq.s32.totalorder %s17, 1
    %p40 = por %p38, %p39
    %p42 = scmp.ne.s32.totalorder %s25, %s41
    %p43 = scmp.eq.s32.totalorder %s17, 0
    %p44 = por %p42, %p43
    %s46 = sadd.s32 %s45, 1
    %p49 = scmp.eq.s32.totalorder %s11, 1
    %p50 = scmp.ne.s32.totalorder %s45, %s47
    %p51 = scmp.eq.s32.totalorder %s11, 0
    %p52 = por %p50, %p51
    %p53 = scmp.ne.s32.totalorder %s45, %s47
    %p54 = scmp.eq.s32.totalorder %s16, 1
    %p55 = por %p53, %p54
    %p56 = scmp.ne.s32.totalorder %s47, %s48
    %p57 = scmp.eq.s32.totalorder %s16, 0
    %p58 = por %p56, %p57
    %p59 = scmp.ne.s32.totalorder %s47, %s48
    %p60 = scmp.eq.s32.totalorder %s17, 1
    %p61 = por %p59, %p60
    %p63 = scmp.ne.s32.totalorder %s48, %s62
    %p64 = scmp.eq.s32.totalorder %s17, 0
    %p65 = por %p63, %p64
    %s67 = sadd.s32 %s66, 1
    %p70 = scmp.eq.s32.totalorder %s11, 1
    %p71 = scmp.ne.s32.totalorder %s66, %s68
    %p72 = scmp.eq.s32.totalorder %s11, 0
    %p73 = por %p71, %p72
    %p74 = scmp.ne.s32.totalorder %s66, %s68
    %p75 = scmp.eq.s32.totalorder %s16, 1
    %p76 = por %p74, %p75
    %p77 = scmp.ne.s32.totalorder %s68, %s69
    %p78 = scmp.eq.s32.totalorder %s16, 0
    %p79 = por %p77, %p78
    %p80 = scmp.ne.s32.totalorder %s68, %s69
    %p81 = scmp.eq.s32.totalorder %s17, 1
    %p82 = por %p80, %p81
    %p84 = scmp.ne.s32.totalorder %s69, %s83
    %p85 = scmp.eq.s32.totalorder %s17, 0
    %p86 = por %p84, %p85
    %s88 = sadd.s32 %s87, 1
    %p91 = scmp.eq.s32.totalorder %s11, 1
    %p92 = scmp.ne.s32.totalorder %s87, %s89
    %p93 = scmp.eq.s32.totalorder %s11, 0
    %p94 = por %p92, %p93
    %p95 = scmp.ne.s32.totalorder %s87, %s89
    %p96 = scmp.eq.s32.totalorder %s16, 1
    %p97 = por %p95, %p96
    %p98 = scmp.ne.s32.totalorder %s89, %s90
    %p99 = scmp.eq.s32.totalorder %s16, 0
    %p100 = por %p98, %p99
    %p101 = scmp.ne.s32.totalorder %s89, %s90
    %p102 = scmp.eq.s32.totalorder %s17, 1
    %p103 = por %p101, %p102
    %p105 = scmp.ne.s32.totalorder %s90, %s104
    %p106 = scmp.eq.s32.totalorder %s17, 0
    %p107 = por %p105, %p106
    %s109 = sadd.s32 %s108, 1
    %p112 = scmp.eq.s32.totalorder %s11, 1
    %p113 = scmp.ne.s32.totalorder %s108, %s110
    %p114 = scmp.eq.s32.totalorder %s11, 0
    %p115 = por %p113, %p114
    %p116 = scmp.ne.s32.totalorder %s108, %s110
    %p117 = scmp.eq.s32.totalorder %s16, 1
    %p118 = por %p116, %p117
    %p119 = scmp.ne.s32.totalorder %s110, %s111
    %p120 = scmp.eq.s32.totalorder %s16, 0
    %p121 = por %p119, %p120
    %p122 = scmp.ne.s32.totalorder %s110, %s111
    %p123 = scmp.eq.s32.totalorder %s17, 1
    %p124 = por %p122, %p123
    %p126 = scmp.ne.s32.totalorder %s111, %s125
    %p127 = scmp.eq.s32.totalorder %s17, 0
    %p128 = por %p126, %p127
    %s129 = ssub.s32 %s11, %s18
    %p130 = scmp.eq.s32.totalorder %s129, 0
    %s132 = sadd.s32 %s131, 1
    %s133 = scalar_select %p130, %s131, %s132
    %p136 = pneg %p130
    %p137 = scmp.eq.s32.totalorder %s11, 1
    %p138 = por %p136, %p137
    %p139 = scmp.ne.s32.totalorder %s131, %s134
    %p140 = scmp.eq.s32.totalorder %s11, 0
    %p141 = por %p139, %p140
    %p142 = scmp.ne.s32.totalorder %s131, %s134
    %p143 = scmp.eq.s32.totalorder %s16, 1
    %p144 = por %p142, %p143
    %p145 = scmp.ne.s32.totalorder %s134, %s135
    %p146 = scmp.eq.s32.totalorder %s16, 0
    %p147 = por %p145, %p146
    %p148 = scmp.ne.s32.totalorder %s134, %s135
    %p149 = scmp.eq.s32.totalorder %s17, 1
    %p150 = por %p148, %p149
    %p152 = scmp.ne.s32.totalorder %s135, %s151
    %p153 = scmp.eq.s32.totalorder %s17, 0
    %p154 = por %p152, %p153
    %p155 = scmp.le.s32.totalorder 1, %s11
    %p156 = scmp.lt.s32.totalorder %s11, 3
    %p157 = pnand %p155, %p156
    %p158 = pneg %p157
    // Predicated region
    $region9: #{instrument3_forward.2} parent=5 // pred_check
      _
    $region10: #{instrument3_forward.2} parent=5 // pred_check_branch
      %160 = sbr.rel (%p157) target = $region12
    $region11: #{instrument3_forward.2} parent=5 // pred_region
      %s161 = ssub.s32 %s11, 1
      // Predicated region
      $region13: #{instrument3_forward.2} parent=11 // pred_check
        %p162 = pneg %p58
      $region14: #{instrument3_forward.2} parent=11 // pred_check_branch
        %164 = sbr.rel (%p162) target = $region16
      $region15: #{instrument3_forward.2} parent=11 // pred_region
        _
      $region16: #{instrument3_forward.2} parent=11 // pred_fallthru
        _
      // Predicated region
      $region17: #{instrument3_forward.2} parent=11 // pred_check
        %p165 = pneg %p79
      $region18: #{instrument3_forward.2} parent=11 // pred_check_branch
        %167 = sbr.rel (%p165) target = $region20
      $region19: #{instrument3_forward.2} parent=11 // pred_region
        _
      $region20: #{instrument3_forward.2} parent=11 // pred_fallthru
        _
      // Predicated region
      $region21: #{instrument3_forward.2} parent=11 // pred_check
        %p168 = pneg %p100
      $region22: #{instrument3_forward.2} parent=11 // pred_check_branch
        %170 = sbr.rel (%p168) target = $region24
      $region23: #{instrument3_forward.2} parent=11 // pred_region
        _
      $region24: #{instrument3_forward.2} parent=11 // pred_fallthru
        _
      // Predicated region
      $region25: #{instrument3_forward.2} parent=11 // pred_check
        %p171 = pneg %p121
      $region26: #{instrument3_forward.2} parent=11 // pred_check_branch
        %173 = sbr.rel (%p171) target = $region28
      $region27: #{instrument3_forward.2} parent=11 // pred_region
        _
      $region28: #{instrument3_forward.2} parent=11 // pred_fallthru
        _
    $region12: #{instrument3_forward.2} parent=5 // pred_fallthru
      _
    %p174 = scmp.lt.s32.totalorder %s11, 2
    // Predicated region
    $region29: #{instrument3_forward.2} parent=5 // pred_check
      %p175 = pneg %p174
    $region30: #{instrument3_forward.2} parent=5 // pred_check_branch
      %177 = sbr.rel (%p175) target = $region32
    $region31: #{instrument3_forward.2} parent=5 // pred_region
      // Predicated region
      $region33: #{instrument3_forward.2} parent=31 // pred_check
        %p178 = pneg %p31
      $region34: #{instrument3_forward.2} parent=31 // pred_check_branch
        %180 = sbr.rel (%p178) target = $region36
      $region35: #{instrument3_forward.2} parent=31 // pred_region
        %s181 = smul.u32 3, %s11
        %p182 = scmp.lt.s32.totalorder %s181, 5
        %s183 = scalar_select %p182, %s181, 5
        %s184 = smul.addr %s183, 8
        %s185 = scalar_lea.vmem %s0, %s184
        %s186 = smul.u32 3, %s11
      $region36: #{instrument3_forward.2} parent=31 // pred_fallthru
        _
    $region32: #{instrument3_forward.2} parent=5 // pred_fallthru
      _
    %p187 = scmp.le.s32.totalorder 1, %s11
    %p188 = scmp.lt.s32.totalorder %s11, 3
    %p189 = pnand %p187, %p188
    %p190 = pneg %p189
    // Predicated region
    $region37: #{instrument3_forward.2} parent=5 // pred_check
      _
    $region38: #{instrument3_forward.2} parent=5 // pred_check_branch
      %192 = sbr.rel (%p189) target = $region40
    $region39: #{instrument3_forward.2} parent=5 // pred_region
      %s193 = ssub.s32 %s11, 1
      %s194 = smul.u32 3, %s16
      %p195 = scmp.lt.s32.totalorder %s194, 5
      %s196 = scalar_select %p195, %s194, 5
      %s197 = smul.addr %s196, 8
      %s198 = scalar_lea.vmem %s0, %s197
      %p199 = pneg %p37
      %p200 = pneg %p34
      %p201 = pneg %p58
      %p202 = pneg %p55
      %p203 = pneg %p79
      %p204 = pneg %p76
      %p205 = pneg %p100
      %p206 = pneg %p97
      %p207 = pneg %p121
      %p208 = pneg %p118
      %p209 = pneg %p147
      %p210 = pneg %p144
      %s211 = smul.u32 3, %s16
      %p212 = scmp.lt.s32.totalorder %s211, 5
      %s213 = scalar_select %p212, %s211, 5
      %s214 = smul.addr %s213, 8
      %s215 = scalar_lea.vmem %s5, %s214
      %s216 = smul.u32 3, %s16
      %p217 = scmp.lt.s32.totalorder %s216, 5
      %s218 = scalar_select %p217, %s216, 5
      %s219 = smul.addr %s218, 8
      %s220 = scalar_lea.vmem %s0, %s219
      %s221 = smul.u32 3, %s16
      %s222 = smul.u32 3, %s16
      %p223 = scmp.lt.s32.totalorder %s222, 5
      %s224 = scalar_select %p223, %s222, 5
      %s225 = smul.addr %s224, 8
      %s226 = scalar_lea.vmem %s5, %s225
      %s227 = smul.u32 3, %s16
      %v228 = vld [vmem:[%s220] sm:$0xff]
      %v229 = vld [vmem:[%s220 + $0x8] sm:$0xff]
      %v230 = vld [vmem:[%s220 + $0x10] sm:$0xff]
      %v231 = vld [vmem:[%s1] sm:$0xff]
      %v232 = vld [vmem:[%s1 + $0x8] sm:$0xff]
      %v233 = vld [vmem:[%s1 + $0x10] sm:$0xff]
      %v234 = vld [vmem:[%s1 + $0x18] sm:$0xff]
      %v235 = vld [vmem:[%s1 + $0x20] sm:$0xff]
      %v236 = vld [vmem:[%s1 + $0x28] sm:$0xff]
      %v237 = vld [vmem:[%s1 + $0x30] sm:$0xff]
      %v238 = vld [vmem:[%s1 + $0x38] sm:$0xff]
      %v239 = vld [vmem:[%s1 + $0x40] sm:$0xff]
      %v240 = vld [vmem:[%s1 + $0x48] sm:$0xff]
      %v241 = vld [vmem:[%s1 + $0x50] sm:$0xff]
      %v242 = vld [vmem:[%s1 + $0x58] sm:$0xff]
      %v243 = vld [vmem:[%s1 + $0x60] sm:$0xff]
      %v244 = vld [vmem:[%s1 + $0x68] sm:$0xff]
      %v245 = vld [vmem:[%s1 + $0x70] sm:$0xff]
      %v246 = vld [vmem:[%s1 + $0x78] sm:$0xff]
      %v247 = vld [vmem:[%s2] sm:$0x1]
      %v249 = vlaneseq
      %v250 = vshrl.u32 %v249, 7
      %v251 = vsub.s32 0, %v250
      %v252 = vrot.slane %v247, %v251
      %254 = vmatprep.subr.mxu0 0.0
      %255 = vmatpush1.msra.mxu0 %v231
      %256 = vmatprep.subr.mxu0 0.0
      %257 = vmatpush1.msra.mxu0 %v232
      %258 = vmatprep.subr.mxu0 0.0
      %259 = vmatpush1.msra.mxu0 %v233
      %260 = vmatprep.subr.mxu0 0.0
      %261 = vmatpush1.msra.mxu0 %v234
      %262 = vmatprep.subr.mxu0 0.0
      %263 = vmatpush1.msra.mxu0 %v235
      %264 = vmatprep.subr.mxu0 0.0
      %265 = vmatpush1.msra.mxu0 %v236
      %266 = vmatprep.subr.mxu0 0.0
      %267 = vmatpush1.msra.mxu0 %v237
      %268 = vmatprep.subr.mxu0 0.0
      %269 = vmatpush1.msra.mxu0 %v238
      %270 = vmatprep.subr.mxu0 0.0
      %271 = vmatpush1.msra.mxu0 %v239
      %272 = vmatprep.subr.mxu0 0.0
      %273 = vmatpush1.msra.mxu0 %v240
      %274 = vmatprep.subr.mxu0 0.0
      %275 = vmatpush1.msra.mxu0 %v241
      %276 = vmatprep.subr.mxu0 0.0
      %277 = vmatpush1.msra.mxu0 %v242
      %278 = vmatprep.subr.mxu0 0.0
      %279 = vmatpush1.msra.mxu0 %v243
      %280 = vmatprep.subr.mxu0 0.0
      %281 = vmatpush1.msra.mxu0 %v244
      %282 = vmatprep.subr.mxu0 0.0
      %283 = vmatpush1.msra.mxu0 %v245
      %284 = vmatprep.subr.mxu0 0.0
      %285 = vmatpush1.msra.mxu0 %v246
      %286 = vmatprep.subr.mxu0 0.0
      %287 = vmatpush1.msra.mxu0 0.0
      %288 = vmatprep.subr.mxu0 0.0
      %289 = vmatpush1.msra.mxu0 0.0
      %290 = vmatprep.subr.mxu0 0.0
      %291 = vmatpush1.msra.mxu0 0.0
      %292 = vmatprep.subr.mxu0 0.0
      %293 = vmatpush1.msra.mxu0 0.0
      %294 = vmatprep.subr.mxu0 0.0
      %295 = vmatpush1.msra.mxu0 0.0
      %296 = vmatprep.subr.mxu0 0.0
      %297 = vmatpush1.msra.mxu0 0.0
      %298 = vmatprep.subr.mxu0 0.0
      %299 = vmatpush1.msra.mxu0 0.0
      %300 = vmatprep.subr.mxu0 0.0
      %301 = vmatpush1.msra.mxu0 0.0
      %302 = vmatprep.subr.mxu0 0.0
      %303 = vmatpush1.msra.mxu0 0.0
      %304 = vmatprep.subr.mxu0 0.0
      %305 = vmatpush1.msra.mxu0 0.0
      %306 = vmatprep.subr.mxu0 0.0
      %307 = vmatpush1.msra.mxu0 0.0
      %308 = vmatprep.subr.mxu0 0.0
      %309 = vmatpush1.msra.mxu0 0.0
      %310 = vmatprep.subr.mxu0 0.0
      %311 = vmatpush1.msra.mxu0 0.0
      %312 = vmatprep.subr.mxu0 0.0
      %313 = vmatpush1.msra.mxu0 0.0
      %314 = vmatprep.subr.mxu0 0.0
      %315 = vmatpush1.msra.mxu0 0.0
      %316 = vmatprep.subr.mxu0 0.0
      %317 = vmatpush1.msra.mxu0 0.0
      %318 = vmatprep.mubr.f32.mxu0 0.0
      %319 = vmatmul.mubr.f32.gmra.mrb[0].mxu0 %v228
      %v320 = vpop.f32.mrb[0].mxu0
      %v321 = vadd.f32 %v252, %v320
      %v322 = vpop.f32.mrb[0].mxu0
      %323 = vmatprep.mubr.f32.mxu0 0.0
      %324 = vmatmul.mubr.f32.gmra.mrb[0].mxu0 %v229
      %v325 = vpop.f32.mrb[0].mxu0
      %v326 = vadd.f32 %v252, %v325
      %v327 = vpop.f32.mrb[0].mxu0
      %328 = vmatprep.mubr.f32.mxu0 0.0
      %329 = vmatmul.mubr.f32.gmra.mrb[0].mxu0 %v230
      %v330 = vpop.f32.mrb[0].mxu0
      %v331 = vadd.f32 %v252, %v330
      %v332 = vpop.f32.mrb[0].mxu0
      %333 = vdwg.mxu0
      %v334 = vmax.f32 %v321, 0.0
      %v335 = vmax.f32 %v326, 0.0
      %v336 = vmax.f32 %v331, 0.0
      %v337 = vld [vmem:[%s3] sm:$0xff]
      %v338 = vld [vmem:[%s3 + $0x8] sm:$0xff]
      %v339 = vld [vmem:[%s3 + $0x20] sm:$0xff]
      %v340 = vld [vmem:[%s3 + $0x28] sm:$0xff]
      %v341 = vld [vmem:[%s3 + $0x40] sm:$0xff]
      %v342 = vld [vmem:[%s3 + $0x48] sm:$0xff]
      %v343 = vld [vmem:[%s3 + $0x60] sm:$0xff]
      %v344 = vld [vmem:[%s3 + $0x68] sm:$0xff]
      %v345 = vld [vmem:[%s3 + $0x80] sm:$0xff]
      %v346 = vld [vmem:[%s3 + $0x88] sm:$0xff]
      %v347 = vld [vmem:[%s3 + $0xa0] sm:$0xff]
      %v348 = vld [vmem:[%s3 + $0xa8] sm:$0xff]
      %v349 = vld [vmem:[%s3 + $0xc0] sm:$0xff]
      %v350 = vld [vmem:[%s3 + $0xc8] sm:$0xff]
      %v351 = vld [vmem:[%s3 + $0xe0] sm:$0xff]
      %v352 = vld [vmem:[%s3 + $0xe8] sm:$0xff]
      %v353 = vld [vmem:[%s3 + $0x100] sm:$0xff]
      %v354 = vld [vmem:[%s3 + $0x108] sm:$0xff]
      %v355 = vld [vmem:[%s3 + $0x120] sm:$0xff]
      %v356 = vld [vmem:[%s3 + $0x128] sm:$0xff]
      %v357 = vld [vmem:[%s3 + $0x140] sm:$0xff]
      %v358 = vld [vmem:[%s3 + $0x148] sm:$0xff]
      %v359 = vld [vmem:[%s3 + $0x160] sm:$0xff]
      %v360 = vld [vmem:[%s3 + $0x168] sm:$0xff]
      %v361 = vld [vmem:[%s3 + $0x180] sm:$0xff]
      %v362 = vld [vmem:[%s3 + $0x188] sm:$0xff]
      %v363 = vld [vmem:[%s3 + $0x1a0] sm:$0xff]
      %v364 = vld [vmem:[%s3 + $0x1a8] sm:$0xff]
      %v365 = vld [vmem:[%s3 + $0x1c0] sm:$0xff]
      %v366 = vld [vmem:[%s3 + $0x1c8] sm:$0xff]
      %v367 = vld [vmem:[%s3 + $0x1e0] sm:$0xff]
      %v368 = vld [vmem:[%s3 + $0x1e8] sm:$0xff]
      %v369 = vld [vmem:[%s4] sm:$0x3]
      %v371 = vlaneseq
      %v372 = vshrl.u32 %v371, 7
      %v373 = vsub.s32 0, %v372
      %v374 = vrot.slane %v369, %v373
      %v375 = vlaneseq
      %v376 = vshrl.u32 %v375, 7
      %v377 = vsub.s32 1, %v376
      %v378 = vrot.slane %v369, %v377
      %381 = vmatprep.subr.mxu0 %v338
      %382 = vmatpush1.msra.mxu0 %v337
      %383 = vmatprep.subr.mxu0 %v340
      %384 = vmatpush1.msra.mxu0 %v339
      %385 = vmatprep.subr.mxu0 %v342
      %386 = vmatpush1.msra.mxu0 %v341
      %387 = vmatprep.subr.mxu0 %v344
      %388 = vmatpush1.msra.mxu0 %v343
      %389 = vmatprep.subr.mxu0 %v346
      %390 = vmatpush1.msra.mxu0 %v345
      %391 = vmatprep.subr.mxu0 %v348
      %392 = vmatpush1.msra.mxu0 %v347
      %393 = vmatprep.subr.mxu0 %v350
      %394 = vmatpush1.msra.mxu0 %v349
      %395 = vmatprep.subr.mxu0 %v352
      %396 = vmatpush1.msra.mxu0 %v351
      %397 = vmatprep.subr.mxu0 %v354
      %398 = vmatpush1.msra.mxu0 %v353
      %399 = vmatprep.subr.mxu0 %v356
      %400 = vmatpush1.msra.mxu0 %v355
      %401 = vmatprep.subr.mxu0 %v358
      %402 = vmatpush1.msra.mxu0 %v357
      %403 = vmatprep.subr.mxu0 %v360
      %404 = vmatpush1.msra.mxu0 %v359
      %405 = vmatprep.subr.mxu0 %v362
      %406 = vmatpush1.msra.mxu0 %v361
      %407 = vmatprep.subr.mxu0 %v364
      %408 = vmatpush1.msra.mxu0 %v363
      %409 = vmatprep.subr.mxu0 %v366
      %410 = vmatpush1.msra.mxu0 %v365
      %411 = vmatprep.subr.mxu0 %v368
      %412 = vmatpush1.msra.mxu0 %v367
      %413 = vmatprep.subr.mxu0 0.0
      %414 = vmatpush1.msra.mxu0 0.0
      %415 = vmatprep.subr.mxu0 0.0
      %416 = vmatpush1.msra.mxu0 0.0
      %417 = vmatprep.subr.mxu0 0.0
      %418 = vmatpush1.msra.mxu0 0.0
      %419 = vmatprep.subr.mxu0 0.0
      %420 = vmatpush1.msra.mxu0 0.0
      %421 = vmatprep.subr.mxu0 0.0
      %422 = vmatpush1.msra.mxu0 0.0
      %423 = vmatprep.subr.mxu0 0.0
      %424 = vmatpush1.msra.mxu0 0.0
      %425 = vmatprep.subr.mxu0 0.0
      %426 = vmatpush1.msra.mxu0 0.0
      %427 = vmatprep.subr.mxu0 0.0
      %428 = vmatpush1.msra.mxu0 0.0
      %429 = vmatprep.subr.mxu0 0.0
      %430 = vmatpush1.msra.mxu0 0.0
      %431 = vmatprep.subr.mxu0 0.0
      %432 = vmatpush1.msra.mxu0 0.0
      %433 = vmatprep.subr.mxu0 0.0
      %434 = vmatpush1.msra.mxu0 0.0
      %435 = vmatprep.subr.mxu0 0.0
      %436 = vmatpush1.msra.mxu0 0.0
      %437 = vmatprep.subr.mxu0 0.0
      %438 = vmatpush1.msra.mxu0 0.0
      %439 = vmatprep.subr.mxu0 0.0
      %440 = vmatpush1.msra.mxu0 0.0
      %441 = vmatprep.subr.mxu0 0.0
      %442 = vmatpush1.msra.mxu0 0.0
      %443 = vmatprep.subr.mxu0 0.0
      %444 = vmatpush1.msra.mxu0 0.0
      %445 = vmatprep.mubr.f32.mxu0 0.0
      %446 = vmatmul.mubr.f32.gmra.mrb[0].mxu0 %v334
      %v447 = vpop.f32.mrb[0].mxu0
      %v448 = vadd.f32 %v374, %v447
      %v449 = vpop.f32.mrb[0].mxu0
      %v450 = vadd.f32 %v378, %v449
      %451 = vmatprep.mubr.f32.mxu0 0.0
      %452 = vmatmul.mubr.f32.gmra.mrb[0].mxu0 %v335
      %v453 = vpop.f32.mrb[0].mxu0
      %v454 = vadd.f32 %v374, %v453
      %v455 = vpop.f32.mrb[0].mxu0
      %v456 = vadd.f32 %v378, %v455
      %457 = vmatprep.mubr.f32.mxu0 0.0
      %458 = vmatmul.mubr.f32.gmra.mrb[0].mxu0 %v336
      %v459 = vpop.f32.mrb[0].mxu0
      %v460 = vadd.f32 %v374, %v459
      %v461 = vpop.f32.mrb[0].mxu0
      %v462 = vadd.f32 %v378, %v461
      %463 = vdwg.mxu0
      %465 = vset.pattern.permute.xlu0 64
      %466 = vperm.xlu0 %465, %v228
      %v467 = vpop.permute.xlu0 %466
      %470 = vset.pattern.permute.xlu0 64
      %471 = vperm.xlu0 %470, %v229
      %v472 = vpop.permute.xlu0 %471
      %475 = vset.pattern.permute.xlu0 64
      %476 = vperm.xlu0 %475, %v230
      %v477 = vpop.permute.xlu0 %476
      %v479 = vmul.f32 %v467, %v448
      %v480 = vmul.f32 %v472, %v454
      %v481 = vmul.f32 %v477, %v460
      %v482 = vadd.f32 %v479, 0.0
      %v483 = vadd.f32 %v480, 0.0
      %v484 = vadd.f32 %v481, 0.0
      %485 = vset.pattern.permute.xlu0 65
      %486 = vperm.xlu0 %485, %v228
      %v487 = vpop.permute.xlu0 %486
      %489 = vset.pattern.permute.xlu0 65
      %490 = vperm.xlu0 %489, %v229
      %v491 = vpop.permute.xlu0 %490
      %493 = vset.pattern.permute.xlu0 65
      %494 = vperm.xlu0 %493, %v230
      %v495 = vpop.permute.xlu0 %494
      %v497 = vmul.f32 %v487, %v450
      %v498 = vmul.f32 %v491, %v456
      %v499 = vmul.f32 %v495, %v462
      %v500 = vadd.f32 %v482, %v497
      %v501 = vadd.f32 %v483, %v498
      %v502 = vadd.f32 %v484, %v499
      %v503 = vld [vmem:[%s3 + $0x10] sm:$0xff]
      %v504 = vld [vmem:[%s3 + $0x18] sm:$0xff]
      %v505 = vld [vmem:[%s3 + $0x30] sm:$0xff]
      %v506 = vld [vmem:[%s3 + $0x38] sm:$0xff]
      %v507 = vld [vmem:[%s3 + $0x50] sm:$0xff]
      %v508 = vld [vmem:[%s3 + $0x58] sm:$0xff]
      %v509 = vld [vmem:[%s3 + $0x70] sm:$0xff]
      %v510 = vld [vmem:[%s3 + $0x78] sm:$0xff]
      %v511 = vld [vmem:[%s3 + $0x90] sm:$0xff]
      %v512 = vld [vmem:[%s3 + $0x98] sm:$0xff]
      %v513 = vld [vmem:[%s3 + $0xb0] sm:$0xff]
      %v514 = vld [vmem:[%s3 + $0xb8] sm:$0xff]
      %v515 = vld [vmem:[%s3 + $0xd0] sm:$0xff]
      %v516 = vld [vmem:[%s3 + $0xd8] sm:$0xff]
      %v517 = vld [vmem:[%s3 + $0xf0] sm:$0xff]
      %v518 = vld [vmem:[%s3 + $0xf8] sm:$0xff]
      %v519 = vld [vmem:[%s3 + $0x110] sm:$0xff]
      %v520 = vld [vmem:[%s3 + $0x118] sm:$0xff]
      %v521 = vld [vmem:[%s3 + $0x130] sm:$0xff]
      %v522 = vld [vmem:[%s3 + $0x138] sm:$0xff]
      %v523 = vld [vmem:[%s3 + $0x150] sm:$0xff]
      %v524 = vld [vmem:[%s3 + $0x158] sm:$0xff]
      %v525 = vld [vmem:[%s3 + $0x170] sm:$0xff]
      %v526 = vld [vmem:[%s3 + $0x178] sm:$0xff]
      %v527 = vld [vmem:[%s3 + $0x190] sm:$0xff]
      %v528 = vld [vmem:[%s3 + $0x198] sm:$0xff]
      %v529 = vld [vmem:[%s3 + $0x1b0] sm:$0xff]
      %v530 = vld [vmem:[%s3 + $0x1b8] sm:$0xff]
      %v531 = vld [vmem:[%s3 + $0x1d0] sm:$0xff]
      %v532 = vld [vmem:[%s3 + $0x1d8] sm:$0xff]
      %v533 = vld [vmem:[%s3 + $0x1f0] sm:$0xff]
      %v534 = vld [vmem:[%s3 + $0x1f8] sm:$0xff]
      %v535 = vld [vmem:[%s4 + $0x2] sm:$0x3]
      %v537 = vlaneseq
      %v538 = vshrl.u32 %v537, 7
      %v539 = vsub.s32 0, %v538
      %v540 = vrot.slane %v535, %v539
      %v541 = vlaneseq
      %v542 = vshrl.u32 %v541, 7
      %v543 = vsub.s32 1, %v542
      %v544 = vrot.slane %v535, %v543
      %547 = vmatprep.subr.mxu0 %v504
      %548 = vmatpush1.msra.mxu0 %v503
      %549 = vmatprep.subr.mxu0 %v506
      %550 = vmatpush1.msra.mxu0 %v505
      %551 = vmatprep.subr.mxu0 %v508
      %552 = vmatpush1.msra.mxu0 %v507
      %553 = vmatprep.subr.mxu0 %v510
      %554 = vmatpush1.msra.mxu0 %v509
      %555 = vmatprep.subr.mxu0 %v512
      %556 = vmatpush1.msra.mxu0 %v511
      %557 = vmatprep.subr.mxu0 %v514
      %558 = vmatpush1.msra.mxu0 %v513
      %559 = vmatprep.subr.mxu0 %v516
      %560 = vmatpush1.msra.mxu0 %v515
      %561 = vmatprep.subr.mxu0 %v518
      %562 = vmatpush1.msra.mxu0 %v517
      %563 = vmatprep.subr.mxu0 %v520
      %564 = vmatpush1.msra.mxu0 %v519
      %565 = vmatprep.subr.mxu0 %v522
      %566 = vmatpush1.msra.mxu0 %v521
      %567 = vmatprep.subr.mxu0 %v524
      %568 = vmatpush1.msra.mxu0 %v523
      %569 = vmatprep.subr.mxu0 %v526
      %570 = vmatpush1.msra.mxu0 %v525
      %571 = vmatprep.subr.mxu0 %v528
      %572 = vmatpush1.msra.mxu0 %v527
      %573 = vmatprep.subr.mxu0 %v530
      %574 = vmatpush1.msra.mxu0 %v529
      %575 = vmatprep.subr.mxu0 %v532
      %576 = vmatpush1.msra.mxu0 %v531
      %577 = vmatprep.subr.mxu0 %v534
      %578 = vmatpush1.msra.mxu0 %v533
      %579 = vmatprep.subr.mxu0 0.0
      %580 = vmatpush1.msra.mxu0 0.0
      %581 = vmatprep.subr.mxu0 0.0
      %582 = vmatpush1.msra.mxu0 0.0
      %583 = vmatprep.subr.mxu0 0.0
      %584 = vmatpush1.msra.mxu0 0.0
      %585 = vmatprep.subr.mxu0 0.0
      %586 = vmatpush1.msra.mxu0 0.0
      %587 = vmatprep.subr.mxu0 0.0
      %588 = vmatpush1.msra.mxu0 0.0
      %589 = vmatprep.subr.mxu0 0.0
      %590 = vmatpush1.msra.mxu0 0.0
      %591 = vmatprep.subr.mxu0 0.0
      %592 = vmatpush1.msra.mxu0 0.0
      %593 = vmatprep.subr.mxu0 0.0
      %594 = vmatpush1.msra.mxu0 0.0
      %595 = vmatprep.subr.mxu0 0.0
      %596 = vmatpush1.msra.mxu0 0.0
      %597 = vmatprep.subr.mxu0 0.0
      %598 = vmatpush1.msra.mxu0 0.0
      %599 = vmatprep.subr.mxu0 0.0
      %600 = vmatpush1.msra.mxu0 0.0
      %601 = vmatprep.subr.mxu0 0.0
      %602 = vmatpush1.msra.mxu0 0.0
      %603 = vmatprep.subr.mxu0 0.0
      %604 = vmatpush1.msra.mxu0 0.0
      %605 = vmatprep.subr.mxu0 0.0
      %606 = vmatpush1.msra.mxu0 0.0
      %607 = vmatprep.subr.mxu0 0.0
      %608 = vmatpush1.msra.mxu0 0.0
      %609 = vmatprep.subr.mxu0 0.0
      %610 = vmatpush1.msra.mxu0 0.0
      %611 = vmatprep.mubr.f32.mxu0 0.0
      %612 = vmatmul.mubr.f32.gmra.mrb[0].mxu0 %v334
      %v613 = vpop.f32.mrb[0].mxu0
      %v614 = vadd.f32 %v540, %v613
      %v615 = vpop.f32.mrb[0].mxu0
      %v616 = vadd.f32 %v544, %v615
      %617 = vmatprep.mubr.f32.mxu0 0.0
      %618 = vmatmul.mubr.f32.gmra.mrb[0].mxu0 %v335
      %v619 = vpop.f32.mrb[0].mxu0
      %v620 = vadd.f32 %v540, %v619
      %v621 = vpop.f32.mrb[0].mxu0
      %v622 = vadd.f32 %v544, %v621
      %623 = vmatprep.mubr.f32.mxu0 0.0
      %624 = vmatmul.mubr.f32.gmra.mrb[0].mxu0 %v336
      %v625 = vpop.f32.mrb[0].mxu0
      %v626 = vadd.f32 %v540, %v625
      %v627 = vpop.f32.mrb[0].mxu0
      %v628 = vadd.f32 %v544, %v627
      %629 = vdwg.mxu0
      %630 = vset.pattern.permute.xlu0 66
      %631 = vperm.xlu0 %630, %v228
      %v632 = vpop.permute.xlu0 %631
      %634 = vset.pattern.permute.xlu0 66
      %635 = vperm.xlu0 %634, %v229
      %v636 = vpop.permute.xlu0 %635
      %638 = vset.pattern.permute.xlu0 66
      %639 = vperm.xlu0 %638, %v230
      %v640 = vpop.permute.xlu0 %639
      %v642 = vmul.f32 %v632, %v614
      %v643 = vmul.f32 %v636, %v620
      %v644 = vmul.f32 %v640, %v626
      %v645 = vadd.f32 %v500, %v642
      %v646 = vadd.f32 %v501, %v643
      %v647 = vadd.f32 %v502, %v644
      %648 = vset.pattern.permute.xlu0 67
      %649 = vperm.xlu0 %648, %v228
      %v650 = vpop.permute.xlu0 %649
      %652 = vset.pattern.permute.xlu0 67
      %653 = vperm.xlu0 %652, %v229
      %v654 = vpop.permute.xlu0 %653
      %656 = vset.pattern.permute.xlu0 67
      %657 = vperm.xlu0 %656, %v230
      %v658 = vpop.permute.xlu0 %657
      %v660 = vmul.f32 %v650, %v616
      %v661 = vmul.f32 %v654, %v622
      %v662 = vmul.f32 %v658, %v628
      %v663 = vadd.f32 %v645, %v660
      %v664 = vadd.f32 %v646, %v661
      %v665 = vadd.f32 %v647, %v662
      %666 = vst [vmem:[%s226] sm:$0xff] %v663
      %667 = vst [vmem:[%s226 + $0x8] sm:$0xff] %v664
      %668 = vst [vmem:[%s226 + $0x10] sm:$0xff] %v665
      %s669 = smul.u32 3, %s16
      %p670 = scmp.lt.s32.totalorder %s669, 5
      %s671 = scalar_select %p670, %s669, 5
      %s672 = smul.addr %s671, 8
      %s673 = scalar_lea.vmem %s5, %s672
      // Predicated region
      $region41: #{instrument3_forward.2} parent=39 // pred_check
        %p674 = pneg %p144
      $region42: #{instrument3_forward.2} parent=39 // pred_check_branch
        %676 = sbr.rel (%p674) target = $region44
      $region43: #{instrument3_forward.2} parent=39 // pred_region
        %s677 = smul.u32 3, %s16
      $region44: #{instrument3_forward.2} parent=39 // pred_fallthru
        _
    $region40: #{instrument3_forward.2} parent=5 // pred_fallthru
      _
    %p678 = scmp.le.s32.totalorder 2, %s11
    // Predicated region
    $region45: #{instrument3_forward.2} parent=5 // pred_check
      %p679 = pneg %p678
    $region46: #{instrument3_forward.2} parent=5 // pred_check_branch
      %681 = sbr.rel (%p679) target = $region48
    $region47: #{instrument3_forward.2} parent=5 // pred_region
      %s682 = ssub.s32 %s11, 2
      // Predicated region
      $region49: #{instrument3_forward.2} parent=47 // pred_check
        %p683 = pneg %p150
      $region50: #{instrument3_forward.2} parent=47 // pred_check_branch
        %685 = sbr.rel (%p683) target = $region52
      $region51: #{instrument3_forward.2} parent=47 // pred_region
        %s686 = smul.u32 3, %s17
        %p687 = scmp.lt.s32.totalorder %s686, 5
        %s688 = scalar_select %p687, %s686, 5
        %s689 = smul.addr %s688, 8
        %s690 = scalar_lea.vmem %s5, %s689
      $region52: #{instrument3_forward.2} parent=47 // pred_fallthru
        _
    $region48: #{instrument3_forward.2} parent=5 // pred_fallthru
      _
  $region6: #{instrument3_forward.2} parent=0 // loop_footer
    %s15 = sadd.s32 1, %s11
  $region7: #{instrument3_forward.2} parent=0 // loop_footer_branch
    %10 = sbr.rel target = $region3
  $region8: #{instrument3_forward.2} parent=0 // loop_exit
    _

</llo_original>
